<compile_context>
chip_gen: v7x
topology: tpu7x:2x2x1
jax: 0.10.0
libtpu: 0.0.40
codegen_flags: <defaults>
</compile_context>

<pallas_src>
import functools

import jax
import jax.numpy as jnp
from jax.experimental import pallas as pl
from jax.experimental.pallas import tpu as pltpu


def _round_up(x, m):
    return ((x + m - 1) // m) * m


def _choose_tb(B):
    """Batch-tile size: 8-aligned; >=2 grid steps when B > 8 (v7x megacore)."""
    if B <= 8:
        return 8
    if B <= 512:
        return _round_up((B + 1) // 2, 8)   # exactly 2 grid steps, minimal padding
    return 256


# ------------------------------ Pallas kernels ------------------------------ #

def _prompt_full_kernel(USER, ITEM, VAL, FLAG,
                        ui_ref,      # [2, TB, H]  bf16  stacked user/item rows
                        w_ref,       # [2, H, O]   bf16  stacked mlp_u/mlp_v weights
                        b_ref,       # [2, O]      f32   stacked biases
                        slab_ref,    # [S, O]            static prompt token rows
                        rating_ref,  # [TB, K_pad] f32   lane-dense rating weights
                        verb_ref,    # [K_pad, O]  f32   verbalizer token rows
                        flag_ref,    # [TB, 1]     f32   per-sample flag selector (0/1)
                        ftab_ref,    # [2, O]      f32   pre-embedded sub_full_words
                        out_ref):    # [TB, S, O]
    TB, S, O = out_ref.shape
    dt = out_ref.dtype

    # 1) static instruction / hard-prompt rows, broadcast over the batch tile
    #    (dynamic rows are overwritten below, their slab content is a don't-care).
    out_ref[...] = jnp.broadcast_to(slab_ref[...][None], (TB, S, O)).astype(dt)

    # 2)+3) user & item branches fused into ONE batched matmul on the MXU:
    #        [2,TB,H] x [2,H,O] -> [2,TB,O], bf16 inputs, f32 accumulation.
    y = jnp.einsum('bmh,bho->bmo', ui_ref[...], w_ref[...],
                   preferred_element_type=jnp.float32)
    u = y[0] + b_ref[0:1, :]                       # f32 bias add
    v = y[1] + b_ref[1:2, :]
    out_ref[:, pl.ds(USER, 1), :] = u[:, None, :].astype(dt)
    out_ref[:, pl.ds(ITEM, 1), :] = v[:, None, :].astype(dt)

    # 4) rating-weighted verbalizer row: lane-dense [TB,K_pad]@[K_pad,O] dot
    #    (padded rating columns / verbalizer rows are zero).
    vals = jnp.dot(rating_ref[...], verb_ref[...],
                   preferred_element_type=jnp.float32)
    out_ref[:, pl.ds(VAL, 1), :] = vals[:, None, :].astype(dt)

    # 5) per-sample "keyword"/"explanation" flag row selected in-kernel from the
    #    resident 2-row table (no [B, O] HBM round trip).  The stand-in
    #    sub_full_words has exactly 2 entries, matching 'keyword explanation'.
    flag_rows = jnp.where(flag_ref[...] >= 0.5, ftab_ref[1:2, :], ftab_ref[0:1, :])
    out_ref[:, pl.ds(FLAG, 1), :] = flag_rows[:, None, :].astype(dt)


def _prompt_short_kernel(USER, ITEM,
                         ui_ref, w_ref, b_ref, slab_ref,
                         out_ref):
    # rating=None path: only static rows + user + item.
    TB, S, O = out_ref.shape
    dt = out_ref.dtype
    out_ref[...] = jnp.broadcast_to(slab_ref[...][None], (TB, S, O)).astype(dt)
    y = jnp.einsum('bmh,bho->bmo', ui_ref[...], w_ref[...],
                   preferred_element_type=jnp.float32)
    u = y[0] + b_ref[0:1, :]
    v = y[1] + b_ref[1:2, :]
    out_ref[:, pl.ds(USER, 1), :] = u[:, None, :].astype(dt)
    out_ref[:, pl.ds(ITEM, 1), :] = v[:, None, :].astype(dt)


def _build_prompt_call(*, Bp, TB, H, O, S, K_pad, rows, with_rating, out_dtype):
    USER, ITEM, VAL, FLAG = rows
    if with_rating:
        kernel = functools.partial(_prompt_full_kernel, USER, ITEM, VAL, FLAG)
    else:
        kernel = functools.partial(_prompt_short_kernel, USER, ITEM)

    tile_b3 = lambda t: (0, t, 0)      # per-batch-tile block of a [2, Bp, *] array
    tile_b2 = lambda t: (t, 0)         # per-batch-tile block of a [Bp, *] array
    const3 = lambda t: (0, 0, 0)       # grid-invariant -> fetched once, VMEM-resident
    const2 = lambda t: (0, 0)

    in_specs = [
        pl.BlockSpec((2, TB, H), tile_b3),       # stacked user/item rows
        pl.BlockSpec((2, H, O), const3),         # stacked mlp weights   (resident)
        pl.BlockSpec((2, O), const2),            # stacked biases        (resident)
        pl.BlockSpec((S, O), const2),            # static token slab     (resident)
    ]
    if with_rating:
        in_specs += [
            pl.BlockSpec((TB, K_pad), tile_b2),  # rating (lane-dense)
            pl.BlockSpec((K_pad, O), const2),    # verbalizer rows       (resident)
            pl.BlockSpec((TB, 1), tile_b2),      # flag selector
            pl.BlockSpec((2, O), const2),        # flag embedding table  (resident)
        ]

    grid_spec = pltpu.PrefetchScalarGridSpec(
        num_scalar_prefetch=0,
        grid=(Bp // TB,),
        in_specs=in_specs,
        out_specs=pl.BlockSpec((TB, S, O), lambda t: (t, 0, 0)),
    )
    return pl.pallas_call(
        kernel,
        grid_spec=grid_spec,
        out_shape=jax.ShapeDtypeStruct((Bp, S, O), out_dtype),
        compiler_params=pltpu.CompilerParams(
            # batch-tile axis is embarrassingly parallel; with >=2 grid steps
            # v7x megacore shards it across both TensorCores.
            dimension_semantics=("parallel",),
            # explicit limit: above v5e's 16 MiB default, within v7x's 64 MiB.
            vmem_limit_bytes=32 * 1024 * 1024,
        ),
    )


# ----------------------------- Module (JAX side) ----------------------------- #

class PromptEncoderPallas:
    def __init__(self, user_num, item_num, hidden, output_hidden, key,
                 param_dtype=jnp.bfloat16):
        self.user_num = user_num
        self.item_num = item_num
        self.hidden = hidden
        self.output_hidden = output_hidden
        self.param_dtype = param_dtype

        ks = jax.random.split(key, 6)
        s = 0.02
        # Embedding tables [num, H]; rows are gathered with one coalesced
        # jnp.take in the wrapper.  bf16 halves HBM traffic; math upcasts to f32.
        self.user_embedding = (jax.random.normal(ks[0], (user_num, hidden),
                                                 jnp.float32) * s).astype(param_dtype)
        self.item_embedding = (jax.random.normal(ks[1], (item_num, hidden),
                                                 jnp.float32) * s).astype(param_dtype)
        # nn.Linear(hidden, output_hidden) weights, pre-transposed to [H, O] and
        # stacked (user=0, item=1) -> one resident block, one batched matmul.
        wu_t = jax.random.normal(ks[2], (hidden, output_hidden), jnp.float32) * s
        wv_t = jax.random.normal(ks[4], (hidden, output_hidden), jnp.float32) * s
        self.w_stacked = jnp.stack([wu_t, wv_t], axis=0).astype(param_dtype)   # [2, H, O]
        bu = jax.random.normal(ks[3], (output_hidden,), jnp.float32) * s
        bv = jax.random.normal(ks[5], (output_hidden,), jnp.float32) * s
        self.b_stacked = jnp.stack([bu, bv], axis=0).astype(jnp.float32)       # [2, O]

        # Deterministic stand-in for tokenizer outputs (fixed token-id lists).
        self.instruction = jnp.array([[2, 5, 7, 9, 11, 13, 15, 17]], jnp.int32)   # [1, 8]
        self.hard_prompt1 = jnp.array([[3, 6, 8, 10]], jnp.int32)                 # [1, 4]
        self.hard_prompt2 = jnp.array([[4, 12]], jnp.int32)                       # [1, 2]
        self.hard_prompt3 = jnp.array([[14, 16]], jnp.int32)                      # [1, 2]
        self.hard_prompt4 = jnp.array([[18, 20, 22]], jnp.int32)                  # [1, 3]
        self.hard_prompt5 = jnp.array([[19, 21]], jnp.int32)                      # [1, 2]
        self.sub_full_words = jnp.array([24, 26], jnp.int32)                      # [2]
        self.verbalizer = jnp.array([30, 31, 32, 33, 34], jnp.int32)              # [5]

        li = self.instruction.shape[1]
        l1 = self.hard_prompt1.shape[1]
        l2 = self.hard_prompt2.shape[1]
        l3 = self.hard_prompt3.shape[1]
        l4 = self.hard_prompt4.shape[1]
        l5 = self.hard_prompt5.shape[1]

        # Row positions of the dynamic entries inside the assembled prompt.
        self.USER_ROW = li + l1
        self.ITEM_ROW = self.USER_ROW + 1 + l2
        self.VAL_ROW = self.ITEM_ROW + 1 + l3
        self.FLAG_ROW = self.VAL_ROW + 1 + l4
        self.S_FULL = self.FLAG_ROW + 1 + l5          # 25 for these prompts
        self.S_SHORT = self.ITEM_ROW + 1 + l3         # 18 (rating=None path)

        # Same bookkeeping attributes as the PyTorch module.
        self.prompt_length = 4 + li + l1 + l2 + l3 + l4 + l5
        self.rating_index = 1 + li + l1 + l2 + l3

        K = int(self.verbalizer.shape[0])
        self.K_pad = max(8, _round_up(K, 8))

        # All static token ids laid out in final-prompt order, with a placeholder
        # id (0) at the dynamic positions (those rows get overwritten in-kernel).
        z = jnp.zeros((1,), jnp.int32)
        self.static_ids_full = jnp.concatenate([
            self.instruction[0], self.hard_prompt1[0], z,
            self.hard_prompt2[0], z, self.hard_prompt3[0], z,
            self.hard_prompt4[0], z, self.hard_prompt5[0]])
        self.static_ids_short = jnp.concatenate([
            self.instruction[0], self.hard_prompt1[0], z,
            self.hard_prompt2[0], z, self.hard_prompt3[0]])

        self._call_cache = {}

    def _get_call(self, Bp, TB, with_rating, out_dtype):
        key = (Bp, TB, with_rating, jnp.dtype(out_dtype).name)
        if key not in self._call_cache:
            self._call_cache[key] = _build_prompt_call(
                Bp=Bp, TB=TB, H=self.hidden, O=self.output_hidden,
                S=self.S_FULL if with_rating else self.S_SHORT,
                K_pad=self.K_pad,
                rows=(self.USER_ROW, self.ITEM_ROW, self.VAL_ROW, self.FLAG_ROW),
                with_rating=with_rating, out_dtype=out_dtype)
        return self._call_cache[key]

    def __call__(self, user_id, item_id, rating, embed_tokens, curr_flag=None):
        B = user_id.shape[0]
        uid = jnp.asarray(user_id, jnp.int32)
        iid = jnp.asarray(item_id, jnp.int32)

        # One coalesced XLA gather per table (clip -> no OOB DMA from bad ids),
        # stacked into the single [2, B, H] kernel operand.
        u_rows = jnp.take(self.user_embedding, uid, axis=0, mode="clip")   # [B, H]
        i_rows = jnp.take(self.item_embedding, iid, axis=0, mode="clip")   # [B, H]
        ui = jnp.stack([u_rows, i_rows], axis=0)                           # [2, B, H]

        TB = _choose_tb(B)
        Bp = _round_up(B, TB)
        pad = Bp - B
        if pad:
            ui = jnp.pad(ui, ((0, 0), (0, pad), (0, 0)))

        if rating is None:
            slab = embed_tokens(self.static_ids_short)                     # [S_short, O]
            call_fn = self._get_call(Bp, TB, False, slab.dtype)
            out = call_fn(ui, self.w_stacked, self.b_stacked, slab)
            return out[:B] if pad else out

        slab = embed_tokens(self.static_ids_full)                          # [S_full, O]
        verb = embed_tokens(self.verbalizer).astype(jnp.float32)           # [K, O]
        K = self.verbalizer.shape[0]
        Kp = self.K_pad
        verb_p = jnp.pad(verb, ((0, Kp - K), (0, 0)))                      # [K_pad, O]
        rating_p = jnp.pad(rating.astype(jnp.float32),
                           ((0, pad), (0, Kp - K)))                        # [Bp, K_pad]

        # Flag handled fully in-kernel: resident 2-row pre-embedded table +
        # per-sample selector column (no [B, O] HBM round trip).
        flag_table = embed_tokens(self.sub_full_words).astype(jnp.float32) # [2, O]
        if curr_flag is None:
            flag_col = jnp.ones((Bp, 1), jnp.float32)                      # always row 1
        else:
            flag_col = jnp.asarray(curr_flag, jnp.float32).reshape(B, 1)
            if pad:
                flag_col = jnp.pad(flag_col, ((0, pad), (0, 0)))

        call_fn = self._get_call(Bp, TB, True, slab.dtype)
        out = call_fn(ui, self.w_stacked, self.b_stacked, slab,
                      rating_p, verb_p, flag_col, flag_table)
        return out[:B] if pad else out


# ----------------------------- pure-JAX reference ----------------------------- #

def reference_forward(enc, user_id, item_id, rating, embed_tokens, curr_flag=None):
    B = user_id.shape[0]
    ue = enc.user_embedding[user_id].astype(jnp.float32)       # [B, H]
    ie = enc.item_embedding[item_id].astype(jnp.float32)       # [B, H]
    wu = enc.w_stacked[0].astype(jnp.float32)
    wv = enc.w_stacked[1].astype(jnp.float32)
    u_out = (ue @ wu + enc.b_stacked[0])[:, None, :]
    i_out = (ie @ wv + enc.b_stacked[1])[:, None, :]

    def rep(tok_ids):
        e = embed_tokens(tok_ids)
        return jnp.broadcast_to(e, (B,) + e.shape[1:])

    if rating is None:
        return jnp.concatenate(
            [rep(enc.instruction), rep(enc.hard_prompt1), u_out,
             rep(enc.hard_prompt2), i_out, rep(enc.hard_prompt3)], axis=-2)

    verb = embed_tokens(enc.verbalizer)[None]                      # [1, K, O]
    values = (rating[:, :, None] * verb).sum(axis=1)               # [B, O]
    if curr_flag is None:
        flag_words = jnp.broadcast_to(enc.sub_full_words[jnp.array([1])], (B, 1))
    else:
        flag_words = enc.sub_full_words[jnp.asarray(curr_flag, jnp.int32)][:, None]
    return jnp.concatenate(
        [rep(enc.instruction), rep(enc.hard_prompt1), u_out,
         rep(enc.hard_prompt2), i_out, rep(enc.hard_prompt3),
         values[:, None, :], rep(enc.hard_prompt4),
         embed_tokens(flag_words), rep(enc.hard_prompt5)], axis=-2)


# ----------------------------------- main ------------------------------------ #

if __name__ == "__main__":
    key = jax.random.PRNGKey(0)
    B, H, O = 16, 128, 256                 # 16 samples -> TB=8, grid=(2,)
    user_num, item_num, vocab = 32, 48, 64

    k_model, k_vocab, k_uid, k_iid, k_rat, k_flag = jax.random.split(key, 6)

    enc = PromptEncoderPallas(user_num, item_num, H, O, k_model)

    # embed_tokens: frozen vocab embedding table, lookup via jnp.take.
    vocab_table = jax.random.normal(k_vocab, (vocab, O), jnp.float32) * 0.02
    embed_tokens = lambda ids: jnp.take(vocab_table, ids, axis=0)

    user_id = jax.random.randint(k_uid, (B,), 0, user_num)
    item_id = jax.random.randint(k_iid, (B,), 0, item_num)
    rating = jax.nn.softmax(jax.random.normal(k_rat, (B, 5), jnp.float32), axis=-1)
    curr_flag = jax.random.randint(k_flag, (B,), 0, 2)

    fwd_full = jax.jit(lambda u, i, r: enc(u, i, r, embed_tokens))
    fwd_flag = jax.jit(lambda u, i, r, f: enc(u, i, r, embed_tokens, f))
    fwd_short = jax.jit(lambda u, i: enc(u, i, None, embed_tokens))

    out = jax.block_until_ready(fwd_full(user_id, item_id, rating))
    out_flag = jax.block_until_ready(fwd_flag(user_id, item_id, rating, curr_flag))
    out_short = jax.block_until_ready(fwd_short(user_id, item_id))

    ref = reference_forward(enc, user_id, item_id, rating, embed_tokens)
    ref_flag = reference_forward(enc, user_id, item_id, rating, embed_tokens, curr_flag)
    ref_short = reference_forward(enc, user_id, item_id, None, embed_tokens)

    assert out.shape == (B, enc.S_FULL, O), out.shape
    assert out_flag.shape == (B, enc.S_FULL, O), out_flag.shape
    assert out_short.shape == (B, enc.S_SHORT, O), out_short.shape
    assert jnp.allclose(out, ref, atol=5e-4, rtol=1e-3), "mismatch (rating path)"
    assert jnp.allclose(out_flag, ref_flag, atol=5e-4, rtol=1e-3), "mismatch (curr_flag path)"
    assert jnp.allclose(out_short, ref_short, atol=5e-4, rtol=1e-3), "mismatch (no-rating path)"

    print("KERNEL_OK")
</pallas_src>

<mosaic_0001>
module attributes {stable_mosaic.version = 11 : i64} {
  func.func @_prompt_full_kernel(%arg0: i32, %arg1: memref<2x8x128xbf16, #tpu.memory_space<vmem>>, %arg2: memref<2x128x256xbf16, #tpu.memory_space<vmem>>, %arg3: memref<2x256xf32, #tpu.memory_space<vmem>>, %arg4: memref<25x256xf32, #tpu.memory_space<vmem>>, %arg5: memref<8x8xf32, #tpu.memory_space<vmem>>, %arg6: memref<8x256xf32, #tpu.memory_space<vmem>>, %arg7: memref<8x1xf32, #tpu.memory_space<vmem>>, %arg8: memref<2x256xf32, #tpu.memory_space<vmem>>, %arg9: memref<8x25x256xf32, #tpu.memory_space<vmem>>) attributes {dimension_semantics = [#tpu.dimension_semantics<parallel>], iteration_bounds = array<i64: 2>, scalar_prefetch = 0 : i64, scratch_operands = 0 : i64, tpu.core_type = #tpu.core_type<tc>, window_params = [{transform_indices = @transform_0, window_bounds = array<i64: 2, 8, 128>}, {pipeline_mode = #tpu.pipeline_mode<synchronous>, transform_indices = @transform_1, window_bounds = array<i64: 2, 128, 256>}, {pipeline_mode = #tpu.pipeline_mode<synchronous>, transform_indices = @transform_2, window_bounds = array<i64: 2, 256>}, {pipeline_mode = #tpu.pipeline_mode<synchronous>, transform_indices = @transform_3, window_bounds = array<i64: 25, 256>}, {transform_indices = @transform_4, window_bounds = array<i64: 8, 8>}, {pipeline_mode = #tpu.pipeline_mode<synchronous>, transform_indices = @transform_5, window_bounds = array<i64: 8, 256>}, {transform_indices = @transform_6, window_bounds = array<i64: 8, 1>}, {pipeline_mode = #tpu.pipeline_mode<synchronous>, transform_indices = @transform_7, window_bounds = array<i64: 2, 256>}, {transform_indices = @transform_8, window_bounds = array<i64: 8, 25, 256>}]} {
    %c0 = arith.constant 0 : index
    %c0_0 = arith.constant 0 : index
    %0 = vector.load %arg4[%c0, %c0_0] : memref<25x256xf32, #tpu.memory_space<vmem>>, vector<25x256xf32>
    %1 = vector.shape_cast %0 : vector<25x256xf32> to vector<1x25x256xf32>
    %2 = vector.shape_cast %1 : vector<1x25x256xf32> to vector<1x25x256xf32>
    %3 = vector.broadcast %2 : vector<1x25x256xf32> to vector<8x25x256xf32>
    %c0_1 = arith.constant 0 : index
    %c0_2 = arith.constant 0 : index
    %c0_3 = arith.constant 0 : index
    %4 = vector.load %arg9[%c0_1, %c0_2, %c0_3] : memref<8x25x256xf32, #tpu.memory_space<vmem>>, vector<8x25x256xf32>
    tpu.vector_store %arg9[%c0_1, %c0_2, %c0_3], %3 {strides = array<i32>} : memref<8x25x256xf32, #tpu.memory_space<vmem>>, vector<8x25x256xf32>,
    %c0_4 = arith.constant 0 : index
    %c0_5 = arith.constant 0 : index
    %c0_6 = arith.constant 0 : index
    %5 = vector.load %arg1[%c0_4, %c0_5, %c0_6] : memref<2x8x128xbf16, #tpu.memory_space<vmem>>, vector<2x8x128xbf16>
    %c0_7 = arith.constant 0 : index
    %c0_8 = arith.constant 0 : index
    %c0_9 = arith.constant 0 : index
    %6 = vector.load %arg2[%c0_7, %c0_8, %c0_9] : memref<2x128x256xbf16, #tpu.memory_space<vmem>>, vector<2x128x256xbf16>
    "tpu.trace_start"() <{level = 10 : i32, message = "bmh,bho->bmo"}> : () -> ()
    %cst = arith.constant dense<0.000000e+00> : vector<2x8x256xf32>
    %7 = tpu.matmul %5, %6, %cst {dimension_numbers = #tpu.dot_dimension_numbers<[2], [1], [1], [2], [0, 0, 0, 1, 1, 2], [0], [0]>} : vector<2x8x128xbf16>, vector<2x128x256xbf16>, vector<2x8x256xf32> -> vector<2x8x256xf32>
    "tpu.trace_stop"() : () -> ()
    %8 = vector.extract_strided_slice %7 {offsets = [0, 0, 0], sizes = [1, 8, 256], strides = [1, 1, 1]} : vector<2x8x256xf32> to vector<1x8x256xf32>
    %9 = vector.shape_cast %8 : vector<1x8x256xf32> to vector<8x256xf32>
    %c0_10 = arith.constant 0 : index
    %c0_11 = arith.constant 0 : index
    %10 = vector.load %arg3[%c0_10, %c0_11] : memref<2x256xf32, #tpu.memory_space<vmem>>, vector<1x256xf32>
    %11 = vector.broadcast %10 : vector<1x256xf32> to vector<8x256xf32>
    %12 = arith.addf %9, %11 : vector<8x256xf32>
    %13 = vector.extract_strided_slice %7 {offsets = [1, 0, 0], sizes = [1, 8, 256], strides = [1, 1, 1]} : vector<2x8x256xf32> to vector<1x8x256xf32>
    %14 = vector.shape_cast %13 : vector<1x8x256xf32> to vector<8x256xf32>
    %c1 = arith.constant 1 : index
    %c0_12 = arith.constant 0 : index
    %15 = vector.load %arg3[%c1, %c0_12] : memref<2x256xf32, #tpu.memory_space<vmem>>, vector<1x256xf32>
    %16 = vector.broadcast %15 : vector<1x256xf32> to vector<8x256xf32>
    %17 = arith.addf %14, %16 : vector<8x256xf32>
    %18 = vector.shape_cast %12 : vector<8x256xf32> to vector<8x1x256xf32>
    %c0_13 = arith.constant 0 : index
    %c12 = arith.constant 12 : index
    %c0_14 = arith.constant 0 : index
    %19 = vector.load %arg9[%c0_13, %c12, %c0_14] : memref<8x25x256xf32, #tpu.memory_space<vmem>>, vector<8x1x256xf32>
    tpu.vector_store %arg9[%c0_13, %c12, %c0_14], %18 {strides = array<i32>} : memref<8x25x256xf32, #tpu.memory_space<vmem>>, vector<8x1x256xf32>,
    %20 = vector.shape_cast %17 : vector<8x256xf32> to vector<8x1x256xf32>
    %c0_15 = arith.constant 0 : index
    %c15 = arith.constant 15 : index
    %c0_16 = arith.constant 0 : index
    %21 = vector.load %arg9[%c0_15, %c15, %c0_16] : memref<8x25x256xf32, #tpu.memory_space<vmem>>, vector<8x1x256xf32>
    tpu.vector_store %arg9[%c0_15, %c15, %c0_16], %20 {strides = array<i32>} : memref<8x25x256xf32, #tpu.memory_space<vmem>>, vector<8x1x256xf32>,
    %c0_17 = arith.constant 0 : index
    %c0_18 = arith.constant 0 : index
    %22 = vector.load %arg5[%c0_17, %c0_18] : memref<8x8xf32, #tpu.memory_space<vmem>>, vector<8x8xf32>
    %c0_19 = arith.constant 0 : index
    %c0_20 = arith.constant 0 : index
    %23 = vector.load %arg6[%c0_19, %c0_20] : memref<8x256xf32, #tpu.memory_space<vmem>>, vector<8x256xf32>
    %cst_21 = arith.constant dense<0.000000e+00> : vector<8x256xf32>
    %24 = tpu.matmul %22, %23, %cst_21 {dimension_numbers = #tpu.dot_dimension_numbers<[1], [0], [0], [1], [0, 0, 1, 1], [], []>} : vector<8x8xf32>, vector<8x256xf32>, vector<8x256xf32> -> vector<8x256xf32>
    %25 = vector.shape_cast %24 : vector<8x256xf32> to vector<8x1x256xf32>
    %c0_22 = arith.constant 0 : index
    %c18 = arith.constant 18 : index
    %c0_23 = arith.constant 0 : index
    %26 = vector.load %arg9[%c0_22, %c18, %c0_23] : memref<8x25x256xf32, #tpu.memory_space<vmem>>, vector<8x1x256xf32>
    tpu.vector_store %arg9[%c0_22, %c18, %c0_23], %25 {strides = array<i32>} : memref<8x25x256xf32, #tpu.memory_space<vmem>>, vector<8x1x256xf32>,
    %c0_24 = arith.constant 0 : index
    %c0_25 = arith.constant 0 : index
    %27 = vector.load %arg7[%c0_24, %c0_25] : memref<8x1xf32, #tpu.memory_space<vmem>>, vector<8x1xf32>
    %cst_26 = arith.constant 5.000000e-01 : f32
    %28 = vector.broadcast %cst_26 : f32 to vector<8x1xf32>
    %29 = arith.cmpf oge, %27, %28 : vector<8x1xf32>
    %c1_27 = arith.constant 1 : index
    %c0_28 = arith.constant 0 : index
    %30 = vector.load %arg8[%c1_27, %c0_28] : memref<2x256xf32, #tpu.memory_space<vmem>>, vector<1x256xf32>
    %c0_29 = arith.constant 0 : index
    %c0_30 = arith.constant 0 : index
    %31 = vector.load %arg8[%c0_29, %c0_30] : memref<2x256xf32, #tpu.memory_space<vmem>>, vector<1x256xf32>
    %32 = vector.shape_cast %29 : vector<8x1xi1> to vector<8x1xi1>
    %33 = vector.broadcast %32 : vector<8x1xi1> to vector<8x256xi1>
    %34 = vector.shape_cast %30 : vector<1x256xf32> to vector<1x256xf32>
    %35 = vector.broadcast %34 : vector<1x256xf32> to vector<8x256xf32>
    %36 = vector.shape_cast %31 : vector<1x256xf32> to vector<1x256xf32>
    %37 = vector.broadcast %36 : vector<1x256xf32> to vector<8x256xf32>
    %38 = arith.select %33, %35, %37 : vector<8x256xi1>, vector<8x256xf32>
    %39 = vector.shape_cast %38 : vector<8x256xf32> to vector<8x1x256xf32>
    %c0_31 = arith.constant 0 : index
    %c22 = arith.constant 22 : index
    %c0_32 = arith.constant 0 : index
    %40 = vector.load %arg9[%c0_31, %c22, %c0_32] : memref<8x25x256xf32, #tpu.memory_space<vmem>>, vector<8x1x256xf32>
    tpu.vector_store %arg9[%c0_31, %c22, %c0_32], %39 {strides = array<i32>} : memref<8x25x256xf32, #tpu.memory_space<vmem>>, vector<8x1x256xf32>,
    return
  }
  func.func @transform_0(%arg0: i32) -> (i32, i32, i32) {
    %c0_i32 = arith.constant 0 : i32
    %c0_i32_0 = arith.constant 0 : i32
    %c0_i32_1 = arith.constant 0 : i32
    return %c0_i32, %arg0, %c0_i32_0 : i32, i32, i32
  }
  func.func @transform_1(%arg0: i32) -> (i32, i32, i32) {
    %c0_i32 = arith.constant 0 : i32
    %c0_i32_0 = arith.constant 0 : i32
    %c0_i32_1 = arith.constant 0 : i32
    %c0_i32_2 = arith.constant 0 : i32
    return %c0_i32, %c0_i32_0, %c0_i32_1 : i32, i32, i32
  }
  func.func @transform_2(%arg0: i32) -> (i32, i32) {
    %c0_i32 = arith.constant 0 : i32
    %c0_i32_0 = arith.constant 0 : i32
    %c0_i32_1 = arith.constant 0 : i32
    return %c0_i32, %c0_i32_0 : i32, i32
  }
  func.func @transform_3(%arg0: i32) -> (i32, i32) {
    %c0_i32 = arith.constant 0 : i32
    %c0_i32_0 = arith.constant 0 : i32
    %c0_i32_1 = arith.constant 0 : i32
    return %c0_i32, %c0_i32_0 : i32, i32
  }
  func.func @transform_4(%arg0: i32) -> (i32, i32) {
    %c0_i32 = arith.constant 0 : i32
    %c0_i32_0 = arith.constant 0 : i32
    return %arg0, %c0_i32 : i32, i32
  }
  func.func @transform_5(%arg0: i32) -> (i32, i32) {
    %c0_i32 = arith.constant 0 : i32
    %c0_i32_0 = arith.constant 0 : i32
    %c0_i32_1 = arith.constant 0 : i32
    return %c0_i32, %c0_i32_0 : i32, i32
  }
  func.func @transform_6(%arg0: i32) -> (i32, i32) {
    %c0_i32 = arith.constant 0 : i32
    %c0_i32_0 = arith.constant 0 : i32
    return %arg0, %c0_i32 : i32, i32
  }
  func.func @transform_7(%arg0: i32) -> (i32, i32) {
    %c0_i32 = arith.constant 0 : i32
    %c0_i32_0 = arith.constant 0 : i32
    %c0_i32_1 = arith.constant 0 : i32
    return %c0_i32, %c0_i32_0 : i32, i32
  }
  func.func @transform_8(%arg0: i32) -> (i32, i32, i32) {
    %c0_i32 = arith.constant 0 : i32
    %c0_i32_0 = arith.constant 0 : i32
    %c0_i32_1 = arith.constant 0 : i32
    return %arg0, %c0_i32, %c0_i32_0 : i32, i32, i32
  }
}

</mosaic_0001>

<llo_original>
// kernel: _lambda_.1
$region0: #{_lambda_.1}
  #allocation0 [shape = 'u32[]', space=smem, size = 0x4, offset = 0x4, fixed_abs, tag = 'smem constant byte address 0x4 - core index']
  #allocation1 [shape = 'u32[144,128]{1,0:T(1,128)}', space=vmem, size = 0x12000, scoped, tag = 'internal scratch']
  %s0 = inlined_call_operand.vmem [shape: bf16[2,16,128], index: 0, kind: input, shape index: {}]
  %s1 = inlined_call_operand.vmem [shape: bf16[2,128,256], index: 1, kind: input, shape index: {}]
  %s2 = inlined_call_operand.vmem [shape: f32[2,256], index: 2, kind: input, shape index: {}]
  %s3 = inlined_call_operand.vmem [shape: f32[25,256], index: 3, kind: input, shape index: {}]
  %s4 = inlined_call_operand.vmem [shape: f32[16,8], index: 4, kind: input, shape index: {}]
  %s5 = inlined_call_operand.vmem [shape: f32[8,256], index: 5, kind: input, shape index: {}]
  %s6 = inlined_call_operand.vmem [shape: f32[16,1], index: 6, kind: input, shape index: {}]
  %s7 = inlined_call_operand.vmem [shape: f32[2,256], index: 7, kind: input, shape index: {}]
  %s8 = inlined_call_operand.vmem [shape: f32[16,25,256], index: 8, kind: output, shape index: {}]
  %s9 = sld [smem:[#allocation0]]
  $region106: #{_lambda_.1} parent=0
    _
  %s11 = ssub.s32 1, %s9
  %s12 = scalar_select 0, %s11, %s9
  $region1: #{_lambda_.1} parent=0
    #allocation2 [shape = 'u8[8192]{0}', space=vmem, size = 0x2000, scoped, tag = 'input window, operand 0']
    loop: start=0, step=1, limit=4
    $region2: #{_lambda_.1} parent=1 // loop_pre_header
      _
    $region3: #{_lambda_.1} parent=1 // loop_header
      %s14 = sphi 0, %s18
      %p15 = scmp.ge.s32.totalorder %s14, 4
      %s24 = sphi 0, %s26
      %s27 = sphi 0, %s24
      %s28 = sphi 0, %s27
      %s44 = sphi 0, %s28
      %s48 = sphi 0, %s48
      %s50 = sphi 0, %s48
      %s51 = sphi 0, %s50
      %s65 = sphi 0, %s51
      %s69 = sphi 0, %s69
      %s71 = sphi 0, %s69
      %s72 = sphi 0, %s71
      %s86 = sphi 0, %s72
      %s90 = sphi 0, %s90
      %s92 = sphi 0, %s90
      %s93 = sphi 0, %s92
      %s107 = sphi 0, %s93
      %s113 = sphi 0, %s115
      %s116 = sphi 0, %s113
      %s117 = sphi 0, %s116
      %s133 = sphi 0, %s117
      %s137 = sphi 0, %s137
      %s139 = sphi 0, %s137
      %s140 = sphi 0, %s139
      %s154 = sphi 0, %s140
      %s160 = sphi 0, %s162
      %s163 = sphi 0, %s160
      %s164 = sphi 0, %s163
      %s180 = sphi 0, %s164
      %s184 = sphi 0, %s184
      %s186 = sphi 0, %s184
      %s187 = sphi 0, %s186
      %s201 = sphi 0, %s187
      %s207 = sphi 0, %s209
      %s210 = sphi 0, %s207
      %s211 = sphi 0, %s210
      %s227 = sphi 0, %s211
    $region4: #{_lambda_.1} parent=1 // loop_header_branch
      %17 = sbr.rel (%p15) target = $region8
    $region5: #{_lambda_.1} parent=1 // loop_body
      %s19 = ssub.s32 %s14, 1
      %s20 = ssub.s32 %s14, 2
      %s21 = sadd.s32 %s14, 1
      %s22 = ssub.s32 %s14, %s21
      %p23 = scmp.eq.s32.totalorder %s22, 0
      %s25 = sadd.s32 %s24, 1
      %s26 = scalar_select %p23, %s24, %s25
      %p29 = pneg %p23
      %p30 = scmp.eq.s32.totalorder %s14, 1
      %p31 = por %p29, %p30
      %p32 = scmp.ne.s32.totalorder %s24, %s27
      %p33 = scmp.eq.s32.totalorder %s14, 0
      %p34 = por %p32, %p33
      %p35 = scmp.ne.s32.totalorder %s24, %s27
      %p36 = scmp.eq.s32.totalorder %s19, 1
      %p37 = por %p35, %p36
      %p38 = scmp.ne.s32.totalorder %s27, %s28
      %p39 = scmp.eq.s32.totalorder %s19, 0
      %p40 = por %p38, %p39
      %p41 = scmp.ne.s32.totalorder %s27, %s28
      %p42 = scmp.eq.s32.totalorder %s20, 1
      %p43 = por %p41, %p42
      %p45 = scmp.ne.s32.totalorder %s28, %s44
      %p46 = scmp.eq.s32.totalorder %s20, 0
      %p47 = por %p45, %p46
      %s49 = sadd.s32 %s48, 1
      %p52 = scmp.eq.s32.totalorder %s14, 1
      %p53 = scmp.ne.s32.totalorder %s48, %s50
      %p54 = scmp.eq.s32.totalorder %s14, 0
      %p55 = por %p53, %p54
      %p56 = scmp.ne.s32.totalorder %s48, %s50
      %p57 = scmp.eq.s32.totalorder %s19, 1
      %p58 = por %p56, %p57
      %p59 = scmp.ne.s32.totalorder %s50, %s51
      %p60 = scmp.eq.s32.totalorder %s19, 0
      %p61 = por %p59, %p60
      %p62 = scmp.ne.s32.totalorder %s50, %s51
      %p63 = scmp.eq.s32.totalorder %s20, 1
      %p64 = por %p62, %p63
      %p66 = scmp.ne.s32.totalorder %s51, %s65
      %p67 = scmp.eq.s32.totalorder %s20, 0
      %p68 = por %p66, %p67
      %s70 = sadd.s32 %s69, 1
      %p73 = scmp.eq.s32.totalorder %s14, 1
      %p74 = scmp.ne.s32.totalorder %s69, %s71
      %p75 = scmp.eq.s32.totalorder %s14, 0
      %p76 = por %p74, %p75
      %p77 = scmp.ne.s32.totalorder %s69, %s71
      %p78 = scmp.eq.s32.totalorder %s19, 1
      %p79 = por %p77, %p78
      %p80 = scmp.ne.s32.totalorder %s71, %s72
      %p81 = scmp.eq.s32.totalorder %s19, 0
      %p82 = por %p80, %p81
      %p83 = scmp.ne.s32.totalorder %s71, %s72
      %p84 = scmp.eq.s32.totalorder %s20, 1
      %p85 = por %p83, %p84
      %p87 = scmp.ne.s32.totalorder %s72, %s86
      %p88 = scmp.eq.s32.totalorder %s20, 0
      %p89 = por %p87, %p88
      %s91 = sadd.s32 %s90, 1
      %p94 = scmp.eq.s32.totalorder %s14, 1
      %p95 = scmp.ne.s32.totalorder %s90, %s92
      %p96 = scmp.eq.s32.totalorder %s14, 0
      %p97 = por %p95, %p96
      %p98 = scmp.ne.s32.totalorder %s90, %s92
      %p99 = scmp.eq.s32.totalorder %s19, 1
      %p100 = por %p98, %p99
      %p101 = scmp.ne.s32.totalorder %s92, %s93
      %p102 = scmp.eq.s32.totalorder %s19, 0
      %p103 = por %p101, %p102
      %p104 = scmp.ne.s32.totalorder %s92, %s93
      %p105 = scmp.eq.s32.totalorder %s20, 1
      %p106 = por %p104, %p105
      %p108 = scmp.ne.s32.totalorder %s93, %s107
      %p109 = scmp.eq.s32.totalorder %s20, 0
      %p110 = por %p108, %p109
      %s111 = ssub.s32 %s14, %s21
      %p112 = scmp.eq.s32.totalorder %s111, 0
      %s114 = sadd.s32 %s113, 1
      %s115 = scalar_select %p112, %s113, %s114
      %p118 = pneg %p112
      %p119 = scmp.eq.s32.totalorder %s14, 1
      %p120 = por %p118, %p119
      %p121 = scmp.ne.s32.totalorder %s113, %s116
      %p122 = scmp.eq.s32.totalorder %s14, 0
      %p123 = por %p121, %p122
      %p124 = scmp.ne.s32.totalorder %s113, %s116
      %p125 = scmp.eq.s32.totalorder %s19, 1
      %p126 = por %p124, %p125
      %p127 = scmp.ne.s32.totalorder %s116, %s117
      %p128 = scmp.eq.s32.totalorder %s19, 0
      %p129 = por %p127, %p128
      %p130 = scmp.ne.s32.totalorder %s116, %s117
      %p131 = scmp.eq.s32.totalorder %s20, 1
      %p132 = por %p130, %p131
      %p134 = scmp.ne.s32.totalorder %s117, %s133
      %p135 = scmp.eq.s32.totalorder %s20, 0
      %p136 = por %p134, %p135
      %s138 = sadd.s32 %s137, 1
      %p141 = scmp.eq.s32.totalorder %s14, 1
      %p142 = scmp.ne.s32.totalorder %s137, %s139
      %p143 = scmp.eq.s32.totalorder %s14, 0
      %p144 = por %p142, %p143
      %p145 = scmp.ne.s32.totalorder %s137, %s139
      %p146 = scmp.eq.s32.totalorder %s19, 1
      %p147 = por %p145, %p146
      %p148 = scmp.ne.s32.totalorder %s139, %s140
      %p149 = scmp.eq.s32.totalorder %s19, 0
      %p150 = por %p148, %p149
      %p151 = scmp.ne.s32.totalorder %s139, %s140
      %p152 = scmp.eq.s32.totalorder %s20, 1
      %p153 = por %p151, %p152
      %p155 = scmp.ne.s32.totalorder %s140, %s154
      %p156 = scmp.eq.s32.totalorder %s20, 0
      %p157 = por %p155, %p156
      %s158 = ssub.s32 %s14, %s21
      %p159 = scmp.eq.s32.totalorder %s158, 0
      %s161 = sadd.s32 %s160, 1
      %s162 = scalar_select %p159, %s160, %s161
      %p165 = pneg %p159
      %p166 = scmp.eq.s32.totalorder %s14, 1
      %p167 = por %p165, %p166
      %p168 = scmp.ne.s32.totalorder %s160, %s163
      %p169 = scmp.eq.s32.totalorder %s14, 0
      %p170 = por %p168, %p169
      %p171 = scmp.ne.s32.totalorder %s160, %s163
      %p172 = scmp.eq.s32.totalorder %s19, 1
      %p173 = por %p171, %p172
      %p174 = scmp.ne.s32.totalorder %s163, %s164
      %p175 = scmp.eq.s32.totalorder %s19, 0
      %p176 = por %p174, %p175
      %p177 = scmp.ne.s32.totalorder %s163, %s164
      %p178 = scmp.eq.s32.totalorder %s20, 1
      %p179 = por %p177, %p178
      %p181 = scmp.ne.s32.totalorder %s164, %s180
      %p182 = scmp.eq.s32.totalorder %s20, 0
      %p183 = por %p181, %p182
      %s185 = sadd.s32 %s184, 1
      %p188 = scmp.eq.s32.totalorder %s14, 1
      %p189 = scmp.ne.s32.totalorder %s184, %s186
      %p190 = scmp.eq.s32.totalorder %s14, 0
      %p191 = por %p189, %p190
      %p192 = scmp.ne.s32.totalorder %s184, %s186
      %p193 = scmp.eq.s32.totalorder %s19, 1
      %p194 = por %p192, %p193
      %p195 = scmp.ne.s32.totalorder %s186, %s187
      %p196 = scmp.eq.s32.totalorder %s19, 0
      %p197 = por %p195, %p196
      %p198 = scmp.ne.s32.totalorder %s186, %s187
      %p199 = scmp.eq.s32.totalorder %s20, 1
      %p200 = por %p198, %p199
      %p202 = scmp.ne.s32.totalorder %s187, %s201
      %p203 = scmp.eq.s32.totalorder %s20, 0
      %p204 = por %p202, %p203
      %s205 = ssub.s32 %s14, %s21
      %p206 = scmp.eq.s32.totalorder %s205, 0
      %s208 = sadd.s32 %s207, 1
      %s209 = scalar_select %p206, %s207, %s208
      %p212 = pneg %p206
      %p213 = scmp.eq.s32.totalorder %s14, 1
      %p214 = por %p212, %p213
      %p215 = scmp.ne.s32.totalorder %s207, %s210
      %p216 = scmp.eq.s32.totalorder %s14, 0
      %p217 = por %p215, %p216
      %p218 = scmp.ne.s32.totalorder %s207, %s210
      %p219 = scmp.eq.s32.totalorder %s19, 1
      %p220 = por %p218, %p219
      %p221 = scmp.ne.s32.totalorder %s210, %s211
      %p222 = scmp.eq.s32.totalorder %s19, 0
      %p223 = por %p221, %p222
      %p224 = scmp.ne.s32.totalorder %s210, %s211
      %p225 = scmp.eq.s32.totalorder %s20, 1
      %p226 = por %p224, %p225
      %p228 = scmp.ne.s32.totalorder %s211, %s227
      %p229 = scmp.eq.s32.totalorder %s20, 0
      %p230 = por %p228, %p229
      %p231 = scmp.le.s32.totalorder 1, %s14
      %p232 = scmp.lt.s32.totalorder %s14, 3
      %p233 = pnand %p231, %p232
      %p234 = pneg %p233
      // Predicated region
      $region9: #{_lambda_.1} parent=5 // pred_check
        _
      $region10: #{_lambda_.1} parent=5 // pred_check_branch
        %236 = sbr.rel (%p233) target = $region12
      $region11: #{_lambda_.1} parent=5 // pred_region
        %s237 = ssub.s32 %s14, 1
        // Predicated region
        $region13: #{_lambda_.1} parent=11 // pred_check
          %p238 = pneg %p61
        $region14: #{_lambda_.1} parent=11 // pred_check_branch
          %240 = sbr.rel (%p238) target = $region16
        $region15: #{_lambda_.1} parent=11 // pred_region
          _
        $region16: #{_lambda_.1} parent=11 // pred_fallthru
          _
        // Predicated region
        $region17: #{_lambda_.1} parent=11 // pred_check
          %p241 = pneg %p82
        $region18: #{_lambda_.1} parent=11 // pred_check_branch
          %243 = sbr.rel (%p241) target = $region20
        $region19: #{_lambda_.1} parent=11 // pred_region
          _
        $region20: #{_lambda_.1} parent=11 // pred_fallthru
          _
        // Predicated region
        $region21: #{_lambda_.1} parent=11 // pred_check
          %p244 = pneg %p103
        $region22: #{_lambda_.1} parent=11 // pred_check_branch
          %246 = sbr.rel (%p244) target = $region24
        $region23: #{_lambda_.1} parent=11 // pred_region
          _
        $region24: #{_lambda_.1} parent=11 // pred_fallthru
          _
        // Predicated region
        $region25: #{_lambda_.1} parent=11 // pred_check
          %p247 = pneg %p150
        $region26: #{_lambda_.1} parent=11 // pred_check_branch
          %249 = sbr.rel (%p247) target = $region28
        $region27: #{_lambda_.1} parent=11 // pred_region
          _
        $region28: #{_lambda_.1} parent=11 // pred_fallthru
          _
        // Predicated region
        $region29: #{_lambda_.1} parent=11 // pred_check
          %p250 = pneg %p197
        $region30: #{_lambda_.1} parent=11 // pred_check_branch
          %252 = sbr.rel (%p250) target = $region32
        $region31: #{_lambda_.1} parent=11 // pred_region
          _
        $region32: #{_lambda_.1} parent=11 // pred_fallthru
          _
      $region12: #{_lambda_.1} parent=5 // pred_fallthru
        _
      %p253 = scmp.lt.s32.totalorder %s14, 2
      // Predicated region
      $region33: #{_lambda_.1} parent=5 // pred_check
        %p254 = pneg %p253
      $region34: #{_lambda_.1} parent=5 // pred_check_branch
        %256 = sbr.rel (%p254) target = $region36
      $region35: #{_lambda_.1} parent=5 // pred_region
        // Predicated region
        $region37: #{_lambda_.1} parent=35 // pred_check
          %p257 = pneg %p34
        $region38: #{_lambda_.1} parent=35 // pred_check_branch
          %259 = sbr.rel (%p257) target = $region40
        $region39: #{_lambda_.1} parent=35 // pred_region
          %s260 = sand.u32 %s24, 1
          %s261 = sand.u32 %s24, 1
          %s262 = smul.addr %s261, 8
          %s263 = scalar_lea.vmem [#allocation2], %s262
          %s264 = smul.addr %s14, 4
          %s265 = scalar_lea.vmem %s0, %s264
          // Predicated region
          $region41: #{_lambda_.1} parent=39 // pred_check
            _
          $region42: #{_lambda_.1} parent=39 // pred_check_branch
            %267 = sbr.rel (0) target = $region44
          $region43: #{_lambda_.1} parent=39 // pred_region
            // Predicated region
            $region45: #{_lambda_.1} parent=43 // pred_check
              _
            $region46: #{_lambda_.1} parent=43 // pred_check_branch
              %269 = sbr.rel target = $region48
            $region47: #{_lambda_.1} parent=43 // pred_region
              // Predicated region
              $region60: #{_lambda_.1} parent=47 // pred_check
                _
              $region61: #{_lambda_.1} parent=47 // pred_check_branch
                %286 = sbr.rel (0) target = $region63
              $region62: #{_lambda_.1} parent=47 // pred_region
                loop: start=0, step=1, limit=1
                $region64: #{_lambda_.1} parent=62 // loop_pre_header
                  _
                $region65: #{_lambda_.1} parent=62 // loop_header
                  %s288 = sphi 0, %s292
                  %p289 = scmp.ge.s32.totalorder %s288, 1
                  %s293 = sphi %s265, %s265
                  %s294 = sphi %s263, %s263
                $region66: #{_lambda_.1} parent=62 // loop_header_branch
                  %291 = sbr.rel (%p289) target = $region70
                $region67: #{_lambda_.1} parent=62 // loop_body
                  _
                $region68: #{_lambda_.1} parent=62 // loop_footer
                  %s292 = sadd.s32 1, %s288
                $region69: #{_lambda_.1} parent=62 // loop_footer_branch
                  %287 = sbr.rel target = $region65
                $region70: #{_lambda_.1} parent=62 // loop_exit
                  _
                loop: start=0, step=1, limit=1
                $region71: #{_lambda_.1} parent=62 // loop_pre_header
                  _
                $region72: #{_lambda_.1} parent=62 // loop_header
                  %s297 = sphi 0, %s301
                  %p298 = scmp.ge.s32.totalorder %s297, 1
                  %s302 = sphi %s265, %s265
                  %s303 = sphi %s263, %s263
                $region73: #{_lambda_.1} parent=62 // loop_header_branch
                  %300 = sbr.rel (%p298) target = $region77
                $region74: #{_lambda_.1} parent=62 // loop_body
                  %v304 = vld [vmem:[%s302] sm:$0xf]
                  %305 = vst [vmem:[%s303] sm:$0xf] %v304
                  %v306 = vld [vmem:[%s302 + $0x8] sm:$0xf]
                  %307 = vst [vmem:[%s303 + $0x4] sm:$0xf] %v306
                $region75: #{_lambda_.1} parent=62 // loop_footer
                  %s301 = sadd.s32 1, %s297
                $region76: #{_lambda_.1} parent=62 // loop_footer_branch
                  %296 = sbr.rel target = $region72
                $region77: #{_lambda_.1} parent=62 // loop_exit
                  _
              $region63: #{_lambda_.1} parent=47 // pred_fallthru
                _
            $region48: #{_lambda_.1} parent=43 // pred_fallthru
              _
            // Predicated region
            $region49: #{_lambda_.1} parent=43 // pred_check
              _
            $region50: #{_lambda_.1} parent=43 // pred_check_branch
              %271 = sbr.rel (0) target = $region52
            $region51: #{_lambda_.1} parent=43 // pred_region
              loop: start=0, step=1, limit=1
              $region53: #{_lambda_.1} parent=51 // loop_pre_header
                _
              $region54: #{_lambda_.1} parent=51 // loop_header
                %s274 = sphi 0, %s278
                %p275 = scmp.ge.s32.totalorder %s274, 1
                %s279 = sphi %s265, %s265
                %s280 = sphi %s263, %s263
              $region55: #{_lambda_.1} parent=51 // loop_header_branch
                %277 = sbr.rel (%p275) target = $region59
              $region56: #{_lambda_.1} parent=51 // loop_body
                %v281 = vld [vmem:[%s279] sm:$0xf]
                %282 = vst [vmem:[%s280] sm:$0xf] %v281
                %v283 = vld [vmem:[%s279 + $0x8] sm:$0xf]
                %284 = vst [vmem:[%s280 + $0x4] sm:$0xf] %v283
              $region57: #{_lambda_.1} parent=51 // loop_footer
                %s278 = sadd.s32 1, %s274
              $region58: #{_lambda_.1} parent=51 // loop_footer_branch
                %273 = sbr.rel target = $region54
              $region59: #{_lambda_.1} parent=51 // loop_exit
                _
            $region52: #{_lambda_.1} parent=43 // pred_fallthru
              _
          $region44: #{_lambda_.1} parent=39 // pred_fallthru
            _
          %308 = vnop
        $region40: #{_lambda_.1} parent=35 // pred_fallthru
          _
        // Predicated region
        $region78: #{_lambda_.1} parent=35 // pred_check
          %p309 = pneg %p123
        $region79: #{_lambda_.1} parent=35 // pred_check_branch
          %311 = sbr.rel (%p309) target = $region81
        $region80: #{_lambda_.1} parent=35 // pred_region
          %p312 = scmp.lt.s32.totalorder %s14, 1
          %s313 = scalar_select %p312, %s14, 1
          %s314 = smul.addr %s313, 8
          %s315 = scalar_lea.vmem %s4, %s314
        $region81: #{_lambda_.1} parent=35 // pred_fallthru
          _
        // Predicated region
        $region82: #{_lambda_.1} parent=35 // pred_check
          %p316 = pneg %p170
        $region83: #{_lambda_.1} parent=35 // pred_check_branch
          %318 = sbr.rel (%p316) target = $region85
        $region84: #{_lambda_.1} parent=35 // pred_region
          %p319 = scmp.lt.s32.totalorder %s14, 1
          %s320 = scalar_select %p319, %s14, 1
          %s321 = smul.addr %s320, 8
          %s322 = scalar_lea.vmem %s6, %s321
        $region85: #{_lambda_.1} parent=35 // pred_fallthru
          _
      $region36: #{_lambda_.1} parent=5 // pred_fallthru
        _
      %p323 = scmp.le.s32.totalorder 1, %s14
      %p324 = scmp.lt.s32.totalorder %s14, 3
      %p325 = pnand %p323, %p324
      %p326 = pneg %p325
      // Predicated region
      $region86: #{_lambda_.1} parent=5 // pred_check
        _
      $region87: #{_lambda_.1} parent=5 // pred_check_branch
        %328 = sbr.rel (%p325) target = $region89
      $region88: #{_lambda_.1} parent=5 // pred_region
        %s329 = ssub.s32 %s14, 1
        %s330 = sand.u32 %s27, 1
        %s331 = sand.u32 %s27, 1
        %s332 = smul.addr %s331, 8
        %s333 = scalar_lea.vmem [#allocation2], %s332
        // Predicated region
        $region90: #{_lambda_.1} parent=88 // pred_check
          %p334 = pneg %p40
        $region91: #{_lambda_.1} parent=88 // pred_check_branch
          %336 = sbr.rel (%p334) target = $region93
        $region92: #{_lambda_.1} parent=88 // pred_region
          _
        $region93: #{_lambda_.1} parent=88 // pred_fallthru
          _
        %s337 = sand.u32 %s27, 1
        %s338 = sand.u32 %s27, 1
        %s339 = smul.addr %s338, 8
        %s340 = scalar_lea.vmem [#allocation2], %s339
        %p341 = pneg %p40
        %p342 = pneg %p37
        %p343 = pneg %p61
        %p344 = pneg %p58
        %p345 = pneg %p82
        %p346 = pneg %p79
        %p347 = pneg %p103
        %p348 = pneg %p100
        %p349 = scmp.lt.s32.totalorder %s19, 1
        %s350 = scalar_select %p349, %s19, 1
        %s351 = smul.addr %s350, 8
        %s352 = scalar_lea.vmem %s4, %s351
        %p353 = pneg %p129
        %p354 = pneg %p126
        %p355 = pneg %p150
        %p356 = pneg %p147
        %p357 = scmp.lt.s32.totalorder %s19, 1
        %s358 = scalar_select %p357, %s19, 1
        %s359 = smul.addr %s358, 8
        %s360 = scalar_lea.vmem %s6, %s359
        %p361 = pneg %p176
        %p362 = pneg %p173
        %p363 = pneg %p197
        %p364 = pneg %p194
        %p365 = pneg %p223
        %p366 = pneg %p220
        %s367 = smul.u32 8, %s19
        %p368 = scmp.lt.s32.totalorder %s367, 15
        %s369 = scalar_select %p368, %s367, 15
        %s370 = smul.addr %s369, 8
        %s371 = smul.addr %s370, 8
        %s372 = scalar_lea.vmem %s8, %s371
        %p373 = scmp.lt.s32.totalorder %s19, 1
        %s374 = scalar_select %p373, %s19, 1
        %s375 = smul.addr %s374, 8
        %s376 = scalar_lea.vmem %s4, %s375
        %p377 = scmp.lt.s32.totalorder %s19, 1
        %s378 = scalar_select %p377, %s19, 1
        %s379 = smul.addr %s378, 8
        %s380 = scalar_lea.vmem %s6, %s379
        %s381 = smul.u32 8, %s19
        %p382 = scmp.lt.s32.totalorder %s381, 15
        %s383 = scalar_select %p382, %s381, 15
        %s384 = smul.addr %s383, 8
        %s385 = smul.addr %s384, 8
        %s386 = scalar_lea.vmem %s8, %s385
        %s387 = smul.u32 8, %s19
        %v389 = vld [vmem:[%s3] sm:$0xff]
        %v390 = vld [vmem:[%s3 + $0x8] sm:$0xff]
        %v391 = vld [vmem:[%s3 + $0x10] sm:$0xff]
        %v392 = vld [vmem:[%s3 + $0x18] sm:$0xff]
        %v393 = vld [vmem:[%s3 + $0x20] sm:$0xff]
        %v394 = vld [vmem:[%s3 + $0x28] sm:$0xff]
        %v395 = vld [vmem:[%s3 + $0x30] sm:$0x1]
        %v396 = vld [vmem:[%s3 + $0x38] sm:$0x1]
        %397 = vst [vmem:[%s386] sm:$0xff] %v389
        %398 = vst [vmem:[%s386 + $0x8] sm:$0xff] %v390
        %399 = vst [vmem:[%s386 + $0x10] sm:$0xff] %v391
        %400 = vst [vmem:[%s386 + $0x18] sm:$0xff] %v392
        %401 = vst [vmem:[%s386 + $0x20] sm:$0xff] %v393
        %402 = vst [vmem:[%s386 + $0x28] sm:$0xff] %v394
        %403 = vst [vmem:[%s386 + $0x30] sm:$0x1] %v395
        %404 = vst [vmem:[%s386 + $0x38] sm:$0x1] %v396
        %405 = vst [vmem:[%s386 + $0x40] sm:$0xff] %v389
        %406 = vst [vmem:[%s386 + $0x48] sm:$0xff] %v390
        %407 = vst [vmem:[%s386 + $0x50] sm:$0xff] %v391
        %408 = vst [vmem:[%s386 + $0x58] sm:$0xff] %v392
        %409 = vst [vmem:[%s386 + $0x60] sm:$0xff] %v393
        %410 = vst [vmem:[%s386 + $0x68] sm:$0xff] %v394
        %411 = vst [vmem:[%s386 + $0x70] sm:$0x1] %v395
        %412 = vst [vmem:[%s386 + $0x78] sm:$0x1] %v396
        %413 = vst [vmem:[%s386 + $0x80] sm:$0xff] %v389
        %414 = vst [vmem:[%s386 + $0x88] sm:$0xff] %v390
        %415 = vst [vmem:[%s386 + $0x90] sm:$0xff] %v391
        %416 = vst [vmem:[%s386 + $0x98] sm:$0xff] %v392
        %417 = vst [vmem:[%s386 + $0xa0] sm:$0xff] %v393
        %418 = vst [vmem:[%s386 + $0xa8] sm:$0xff] %v394
        %419 = vst [vmem:[%s386 + $0xb0] sm:$0x1] %v395
        %420 = vst [vmem:[%s386 + $0xb8] sm:$0x1] %v396
        %421 = vst [vmem:[%s386 + $0xc0] sm:$0xff] %v389
        %422 = vst [vmem:[%s386 + $0xc8] sm:$0xff] %v390
        %423 = vst [vmem:[%s386 + $0xd0] sm:$0xff] %v391
        %424 = vst [vmem:[%s386 + $0xd8] sm:$0xff] %v392
        %425 = vst [vmem:[%s386 + $0xe0] sm:$0xff] %v393
        %426 = vst [vmem:[%s386 + $0xe8] sm:$0xff] %v394
        %427 = vst [vmem:[%s386 + $0xf0] sm:$0x1] %v395
        %428 = vst [vmem:[%s386 + $0xf8] sm:$0x1] %v396
        %429 = vst [vmem:[%s386 + $0x100] sm:$0xff] %v389
        %430 = vst [vmem:[%s386 + $0x108] sm:$0xff] %v390
        %431 = vst [vmem:[%s386 + $0x110] sm:$0xff] %v391
        %432 = vst [vmem:[%s386 + $0x118] sm:$0xff] %v392
        %433 = vst [vmem:[%s386 + $0x120] sm:$0xff] %v393
        %434 = vst [vmem:[%s386 + $0x128] sm:$0xff] %v394
        %435 = vst [vmem:[%s386 + $0x130] sm:$0x1] %v395
        %436 = vst [vmem:[%s386 + $0x138] sm:$0x1] %v396
        %437 = vst [vmem:[%s386 + $0x140] sm:$0xff] %v389
        %438 = vst [vmem:[%s386 + $0x148] sm:$0xff] %v390
        %439 = vst [vmem:[%s386 + $0x150] sm:$0xff] %v391
        %440 = vst [vmem:[%s386 + $0x158] sm:$0xff] %v392
        %441 = vst [vmem:[%s386 + $0x160] sm:$0xff] %v393
        %442 = vst [vmem:[%s386 + $0x168] sm:$0xff] %v394
        %443 = vst [vmem:[%s386 + $0x170] sm:$0x1] %v395
        %444 = vst [vmem:[%s386 + $0x178] sm:$0x1] %v396
        %445 = vst [vmem:[%s386 + $0x180] sm:$0xff] %v389
        %446 = vst [vmem:[%s386 + $0x188] sm:$0xff] %v390
        %447 = vst [vmem:[%s386 + $0x190] sm:$0xff] %v391
        %448 = vst [vmem:[%s386 + $0x198] sm:$0xff] %v392
        %449 = vst [vmem:[%s386 + $0x1a0] sm:$0xff] %v393
        %450 = vst [vmem:[%s386 + $0x1a8] sm:$0xff] %v394
        %451 = vst [vmem:[%s386 + $0x1b0] sm:$0x1] %v395
        %452 = vst [vmem:[%s386 + $0x1b8] sm:$0x1] %v396
        %453 = vst [vmem:[%s386 + $0x1c0] sm:$0xff] %v389
        %454 = vst [vmem:[%s386 + $0x1c8] sm:$0xff] %v390
        %455 = vst [vmem:[%s386 + $0x1d0] sm:$0xff] %v391
        %456 = vst [vmem:[%s386 + $0x1d8] sm:$0xff] %v392
        %457 = vst [vmem:[%s386 + $0x1e0] sm:$0xff] %v393
        %458 = vst [vmem:[%s386 + $0x1e8] sm:$0xff] %v394
        %459 = vst [vmem:[%s386 + $0x1f0] sm:$0x1] %v395
        %460 = vst [vmem:[%s386 + $0x1f8] sm:$0x1] %v396
        %v461 = vld [vmem:[%s333] sm:$0xf]
        %v462 = vld [vmem:[%s333 + $0x4] sm:$0xf]
        %v463 = vld [vmem:[%s1] sm:$0xff]
        %v464 = vld [vmem:[%s1 + $0x8] sm:$0xff]
        %v465 = vld [vmem:[%s1 + $0x10] sm:$0xff]
        %v466 = vld [vmem:[%s1 + $0x18] sm:$0xff]
        %v467 = vld [vmem:[%s1 + $0x20] sm:$0xff]
        %v468 = vld [vmem:[%s1 + $0x28] sm:$0xff]
        %v469 = vld [vmem:[%s1 + $0x30] sm:$0xff]
        %v470 = vld [vmem:[%s1 + $0x38] sm:$0xff]
        %v471 = vld [vmem:[%s1 + $0x40] sm:$0xff]
        %v472 = vld [vmem:[%s1 + $0x48] sm:$0xff]
        %v473 = vld [vmem:[%s1 + $0x50] sm:$0xff]
        %v474 = vld [vmem:[%s1 + $0x58] sm:$0xff]
        %v475 = vld [vmem:[%s1 + $0x60] sm:$0xff]
        %v476 = vld [vmem:[%s1 + $0x68] sm:$0xff]
        %v477 = vld [vmem:[%s1 + $0x70] sm:$0xff]
        %v478 = vld [vmem:[%s1 + $0x78] sm:$0xff]
        %v479 = vld [vmem:[%s1 + $0x80] sm:$0xff]
        %v480 = vld [vmem:[%s1 + $0x88] sm:$0xff]
        %v481 = vld [vmem:[%s1 + $0x90] sm:$0xff]
        %v482 = vld [vmem:[%s1 + $0x98] sm:$0xff]
        %v483 = vld [vmem:[%s1 + $0xa0] sm:$0xff]
        %v484 = vld [vmem:[%s1 + $0xa8] sm:$0xff]
        %v485 = vld [vmem:[%s1 + $0xb0] sm:$0xff]
        %v486 = vld [vmem:[%s1 + $0xb8] sm:$0xff]
        %v487 = vld [vmem:[%s1 + $0xc0] sm:$0xff]
        %v488 = vld [vmem:[%s1 + $0xc8] sm:$0xff]
        %v489 = vld [vmem:[%s1 + $0xd0] sm:$0xff]
        %v490 = vld [vmem:[%s1 + $0xd8] sm:$0xff]
        %v491 = vld [vmem:[%s1 + $0xe0] sm:$0xff]
        %v492 = vld [vmem:[%s1 + $0xe8] sm:$0xff]
        %v493 = vld [vmem:[%s1 + $0xf0] sm:$0xff]
        %v494 = vld [vmem:[%s1 + $0xf8] sm:$0xff]
        %v511 = vunpack.c.l.b16 %v463
        %v512 = vunpack.c.h.b16 %v463
        %v513 = vunpack.c.l.b16 %v464
        %v514 = vunpack.c.h.b16 %v464
        %v515 = vunpack.c.l.b16 %v465
        %v516 = vunpack.c.h.b16 %v465
        %v517 = vunpack.c.l.b16 %v466
        %v518 = vunpack.c.h.b16 %v466
        %v519 = vunpack.c.l.b16 %v467
        %v520 = vunpack.c.h.b16 %v467
        %v521 = vunpack.c.l.b16 %v468
        %v522 = vunpack.c.h.b16 %v468
        %v523 = vunpack.c.l.b16 %v469
        %v524 = vunpack.c.h.b16 %v469
        %v525 = vunpack.c.l.b16 %v470
        %v526 = vunpack.c.h.b16 %v470
        %v527 = vunpack.c.l.b16 %v471
        %v528 = vunpack.c.h.b16 %v471
        %v529 = vunpack.c.l.b16 %v472
        %v530 = vunpack.c.h.b16 %v472
        %v531 = vunpack.c.l.b16 %v473
        %v532 = vunpack.c.h.b16 %v473
        %v533 = vunpack.c.l.b16 %v474
        %v534 = vunpack.c.h.b16 %v474
        %v535 = vunpack.c.l.b16 %v475
        %v536 = vunpack.c.h.b16 %v475
        %v537 = vunpack.c.l.b16 %v476
        %v538 = vunpack.c.h.b16 %v476
        %v539 = vunpack.c.l.b16 %v477
        %v540 = vunpack.c.h.b16 %v477
        %v541 = vunpack.c.l.b16 %v478
        %v542 = vunpack.c.h.b16 %v478
        %v543 = vpack.c.b16 %v513, %v511
        %v544 = vpack.c.b16 %v514, %v512
        %v545 = vpack.c.b16 %v517, %v515
        %v546 = vpack.c.b16 %v518, %v516
        %v547 = vpack.c.b16 %v521, %v519
        %v548 = vpack.c.b16 %v522, %v520
        %v549 = vpack.c.b16 %v525, %v523
        %v550 = vpack.c.b16 %v526, %v524
        %v551 = vpack.c.b16 %v529, %v527
        %v552 = vpack.c.b16 %v530, %v528
        %v553 = vpack.c.b16 %v533, %v531
        %v554 = vpack.c.b16 %v534, %v532
        %v555 = vpack.c.b16 %v537, %v535
        %v556 = vpack.c.b16 %v538, %v536
        %v557 = vpack.c.b16 %v541, %v539
        %v558 = vpack.c.b16 %v542, %v540
        %575 = vmatprep.subr.bf16.mxu0 %v544
        %576 = vmatpush1.bf16.msra.mxu0 %v543
        %577 = vmatprep.subr.bf16.mxu0 %v546
        %578 = vmatpush1.bf16.msra.mxu0 %v545
        %579 = vmatprep.subr.bf16.mxu0 %v548
        %580 = vmatpush1.bf16.msra.mxu0 %v547
        %581 = vmatprep.subr.bf16.mxu0 %v550
        %582 = vmatpush1.bf16.msra.mxu0 %v549
        %583 = vmatprep.subr.bf16.mxu0 %v552
        %584 = vmatpush1.bf16.msra.mxu0 %v551
        %585 = vmatprep.subr.bf16.mxu0 %v554
        %586 = vmatpush1.bf16.msra.mxu0 %v553
        %587 = vmatprep.subr.bf16.mxu0 %v556
        %588 = vmatpush1.bf16.msra.mxu0 %v555
        %589 = vmatprep.subr.bf16.mxu0 %v558
        %590 = vmatpush1.bf16.msra.mxu0 %v557
        %591 = vmatprep.subr.bf16.mxu0 0
        %592 = vmatpush1.bf16.msra.mxu0 0
        %593 = vmatprep.subr.bf16.mxu0 0
        %594 = vmatpush1.bf16.msra.mxu0 0
        %595 = vmatprep.subr.bf16.mxu0 0
        %596 = vmatpush1.bf16.msra.mxu0 0
        %597 = vmatprep.subr.bf16.mxu0 0
        %598 = vmatpush1.bf16.msra.mxu0 0
        %599 = vmatprep.subr.bf16.mxu0 0
        %600 = vmatpush1.bf16.msra.mxu0 0
        %601 = vmatprep.subr.bf16.mxu0 0
        %602 = vmatpush1.bf16.msra.mxu0 0
        %603 = vmatprep.subr.bf16.mxu0 0
        %604 = vmatpush1.bf16.msra.mxu0 0
        %605 = vmatprep.subr.bf16.mxu0 0
        %606 = vmatpush1.bf16.msra.mxu0 0
        %607 = vmatprep.mubr.bf16.mxu0 0
        %608 = vmatmul.mubr.bf16.gmra.mrb[0].mxu0 %v461
        %v609 = vpop.f32.mrb[0].mxu0
        %v610 = vadd.f32 0.0, %v609
        %v611 = vpop.f32.mrb[0].mxu0
        %v612 = vadd.f32 0.0, %v611
        %v613 = vpop.f32.mrb[0].mxu0
        %v614 = vpop.f32.mrb[0].mxu0
        %615 = vdwg.mxu0
        %v632 = vunpack.c.l.b16 %v479
        %v633 = vunpack.c.h.b16 %v479
        %v634 = vunpack.c.l.b16 %v480
        %v635 = vunpack.c.h.b16 %v480
        %v636 = vunpack.c.l.b16 %v481
        %v637 = vunpack.c.h.b16 %v481
        %v638 = vunpack.c.l.b16 %v482
        %v639 = vunpack.c.h.b16 %v482
        %v640 = vunpack.c.l.b16 %v483
        %v641 = vunpack.c.h.b16 %v483
        %v642 = vunpack.c.l.b16 %v484
        %v643 = vunpack.c.h.b16 %v484
        %v644 = vunpack.c.l.b16 %v485
        %v645 = vunpack.c.h.b16 %v485
        %v646 = vunpack.c.l.b16 %v486
        %v647 = vunpack.c.h.b16 %v486
        %v648 = vunpack.c.l.b16 %v487
        %v649 = vunpack.c.h.b16 %v487
        %v650 = vunpack.c.l.b16 %v488
        %v651 = vunpack.c.h.b16 %v488
        %v652 = vunpack.c.l.b16 %v489
        %v653 = vunpack.c.h.b16 %v489
        %v654 = vunpack.c.l.b16 %v490
        %v655 = vunpack.c.h.b16 %v490
        %v656 = vunpack.c.l.b16 %v491
        %v657 = vunpack.c.h.b16 %v491
        %v658 = vunpack.c.l.b16 %v492
        %v659 = vunpack.c.h.b16 %v492
        %v660 = vunpack.c.l.b16 %v493
        %v661 = vunpack.c.h.b16 %v493
        %v662 = vunpack.c.l.b16 %v494
        %v663 = vunpack.c.h.b16 %v494
        %v664 = vpack.c.b16 %v634, %v632
        %v665 = vpack.c.b16 %v635, %v633
        %v666 = vpack.c.b16 %v638, %v636
        %v667 = vpack.c.b16 %v639, %v637
        %v668 = vpack.c.b16 %v642, %v640
        %v669 = vpack.c.b16 %v643, %v641
        %v670 = vpack.c.b16 %v646, %v644
        %v671 = vpack.c.b16 %v647, %v645
        %v672 = vpack.c.b16 %v650, %v648
        %v673 = vpack.c.b16 %v651, %v649
        %v674 = vpack.c.b16 %v654, %v652
        %v675 = vpack.c.b16 %v655, %v653
        %v676 = vpack.c.b16 %v658, %v656
        %v677 = vpack.c.b16 %v659, %v657
        %v678 = vpack.c.b16 %v662, %v660
        %v679 = vpack.c.b16 %v663, %v661
        %696 = vmatprep.subr.bf16.mxu0 %v665
        %697 = vmatpush1.bf16.msra.mxu0 %v664
        %698 = vmatprep.subr.bf16.mxu0 %v667
        %699 = vmatpush1.bf16.msra.mxu0 %v666
        %700 = vmatprep.subr.bf16.mxu0 %v669
        %701 = vmatpush1.bf16.msra.mxu0 %v668
        %702 = vmatprep.subr.bf16.mxu0 %v671
        %703 = vmatpush1.bf16.msra.mxu0 %v670
        %704 = vmatprep.subr.bf16.mxu0 %v673
        %705 = vmatpush1.bf16.msra.mxu0 %v672
        %706 = vmatprep.subr.bf16.mxu0 %v675
        %707 = vmatpush1.bf16.msra.mxu0 %v674
        %708 = vmatprep.subr.bf16.mxu0 %v677
        %709 = vmatpush1.bf16.msra.mxu0 %v676
        %710 = vmatprep.subr.bf16.mxu0 %v679
        %711 = vmatpush1.bf16.msra.mxu0 %v678
        %712 = vmatprep.subr.bf16.mxu0 0
        %713 = vmatpush1.bf16.msra.mxu0 0
        %714 = vmatprep.subr.bf16.mxu0 0
        %715 = vmatpush1.bf16.msra.mxu0 0
        %716 = vmatprep.subr.bf16.mxu0 0
        %717 = vmatpush1.bf16.msra.mxu0 0
        %718 = vmatprep.subr.bf16.mxu0 0
        %719 = vmatpush1.bf16.msra.mxu0 0
        %720 = vmatprep.subr.bf16.mxu0 0
        %721 = vmatpush1.bf16.msra.mxu0 0
        %722 = vmatprep.subr.bf16.mxu0 0
        %723 = vmatpush1.bf16.msra.mxu0 0
        %724 = vmatprep.subr.bf16.mxu0 0
        %725 = vmatpush1.bf16.msra.mxu0 0
        %726 = vmatprep.subr.bf16.mxu0 0
        %727 = vmatpush1.bf16.msra.mxu0 0
        %728 = vmatprep.mubr.bf16.mxu0 0
        %729 = vmatmul.mubr.bf16.gmra.mrb[0].mxu0 %v462
        %v730 = vpop.f32.mrb[0].mxu0
        %v731 = vadd.f32 0.0, %v730
        %v732 = vpop.f32.mrb[0].mxu0
        %v733 = vadd.f32 0.0, %v732
        %v734 = vpop.f32.mrb[0].mxu0
        %v735 = vpop.f32.mrb[0].mxu0
        %736 = vdwg.mxu0
        %v737 = vld [vmem:[%s2] ss:$2 sm:$0x3]
        %v739 = vlaneseq
        %v740 = vshrl.u32 %v739, 7
        %v741 = vsub.s32 0, %v740
        %v742 = vrot.slane %v737, %v741
        %v743 = vlaneseq
        %v744 = vshrl.u32 %v743, 7
        %v745 = vsub.s32 1, %v744
        %v746 = vrot.slane %v737, %v745
        %v749 = vadd.f32 %v610, %v742
        %v750 = vadd.f32 %v612, %v746
        %s751 = scalar_lea.vmem %s2, 1
        %v752 = vld [vmem:[%s751] ss:$2 sm:$0x3]
        %v754 = vlaneseq
        %v755 = vshrl.u32 %v754, 7
        %v756 = vsub.s32 0, %v755
        %v757 = vrot.slane %v752, %v756
        %v758 = vlaneseq
        %v759 = vshrl.u32 %v758, 7
        %v760 = vsub.s32 1, %v759
        %v761 = vrot.slane %v752, %v760
        %v764 = vadd.f32 %v731, %v757
        %v765 = vadd.f32 %v733, %v761
        %v768 = vcombine.low %v749, %v750
        %v769 = vcombine.high %v749, %v750
        %v771 = vunpack.c.l.s4 1966171168
        %v772 = vunpack.c.0.s8 %v771
        %v773 = vlaneseq
        %v774 = vshrl.u32 %v773, 7
        %v775 = vsub.s32 %v772, %v774
        %v776 = vrot.slane %v768, %v775
        %v778 = vunpack.c.l.s4 1966171168
        %v779 = vunpack.c.0.s8 %v778
        %v780 = vlaneseq
        %v781 = vshrl.u32 %v780, 7
        %v782 = vsub.s32 %v779, %v781
        %v783 = vrot.slane %v769, %v782
        %v784 = vcombine.high %v776, %v776
        %v785 = vcombine.high %v783, %v783
        %v787 = vunpack.c.l.s4 1966171168
        %v788 = vunpack.c.0.s8 %v787
        %v789 = vlaneseq
        %v790 = vshrl.u32 %v789, 7
        %v791 = vsub.s32 %v788, %v790
        %v792 = vrot.slane %v776, %v791
        %v794 = vunpack.c.l.s4 1966171168
        %v795 = vunpack.c.0.s8 %v794
        %v796 = vlaneseq
        %v797 = vshrl.u32 %v796, 7
        %v798 = vsub.s32 %v795, %v797
        %v799 = vrot.slane %v783, %v798
        %v801 = vunpack.c.l.s4 1966171168
        %v802 = vunpack.c.0.s8 %v801
        %v803 = vlaneseq
        %v804 = vshrl.u32 %v803, 7
        %v805 = vsub.s32 %v802, %v804
        %v806 = vrot.slane %v784, %v805
        %v808 = vunpack.c.l.s4 1966171168
        %v809 = vunpack.c.0.s8 %v808
        %v810 = vlaneseq
        %v811 = vshrl.u32 %v810, 7
        %v812 = vsub.s32 %v809, %v811
        %v813 = vrot.slane %v785, %v812
        %v814 = vcombine.high %v792, %v792
        %v815 = vcombine.high %v799, %v799
        %v816 = vcombine.high %v806, %v806
        %v817 = vcombine.high %v813, %v813
        %v826 = vlaneseq
        %vm827 = vcmp.ge.s32.totalorder %v826, 0
        %vm828 = vcmp.lt.s32.totalorder %v826, 256
        %vm829 = vmand %vm827, %vm828
        %s830 = scalar_lea.vmem %s386, 20
        %831 = vst.msk [vmem:[%s830] ss:$8 sm:$0x3] %vm829, %v792
        %832 = vst.msk [vmem:[%s830] ss:$8 sm:$0x0] %vm829, %v792
        %s833 = scalar_lea.vmem %s386, 84
        %834 = vst.msk [vmem:[%s833] ss:$8 sm:$0x3] %vm829, %v806
        %835 = vst.msk [vmem:[%s833] ss:$8 sm:$0x0] %vm829, %v806
        %s836 = scalar_lea.vmem %s386, 148
        %837 = vst.msk [vmem:[%s836] ss:$8 sm:$0x3] %vm829, %v814
        %838 = vst.msk [vmem:[%s836] ss:$8 sm:$0x0] %vm829, %v814
        %s839 = scalar_lea.vmem %s386, 212
        %840 = vst.msk [vmem:[%s839] ss:$8 sm:$0x3] %vm829, %v816
        %841 = vst.msk [vmem:[%s839] ss:$8 sm:$0x0] %vm829, %v816
        %s842 = scalar_lea.vmem %s386, 276
        %843 = vst.msk [vmem:[%s842] ss:$8 sm:$0x3] %vm829, %v799
        %844 = vst.msk [vmem:[%s842] ss:$8 sm:$0x0] %vm829, %v799
        %s845 = scalar_lea.vmem %s386, 340
        %846 = vst.msk [vmem:[%s845] ss:$8 sm:$0x3] %vm829, %v813
        %847 = vst.msk [vmem:[%s845] ss:$8 sm:$0x0] %vm829, %v813
        %s848 = scalar_lea.vmem %s386, 404
        %849 = vst.msk [vmem:[%s848] ss:$8 sm:$0x3] %vm829, %v815
        %850 = vst.msk [vmem:[%s848] ss:$8 sm:$0x0] %vm829, %v815
        %s851 = scalar_lea.vmem %s386, 468
        %852 = vst.msk [vmem:[%s851] ss:$8 sm:$0x3] %vm829, %v817
        %853 = vst.msk [vmem:[%s851] ss:$8 sm:$0x0] %vm829, %v817
        %v856 = vcombine.low %v764, %v765
        %v857 = vcombine.high %v764, %v765
        %v859 = vunpack.c.l.s4 1966171168
        %v860 = vunpack.c.0.s8 %v859
        %v861 = vlaneseq
        %v862 = vshrl.u32 %v861, 7
        %v863 = vsub.s32 %v860, %v862
        %v864 = vrot.slane %v856, %v863
        %v866 = vunpack.c.l.s4 1966171168
        %v867 = vunpack.c.0.s8 %v866
        %v868 = vlaneseq
        %v869 = vshrl.u32 %v868, 7
        %v870 = vsub.s32 %v867, %v869
        %v871 = vrot.slane %v857, %v870
        %v872 = vcombine.high %v864, %v864
        %v873 = vcombine.high %v871, %v871
        %v875 = vunpack.c.l.s4 1966171168
        %v876 = vunpack.c.0.s8 %v875
        %v877 = vlaneseq
        %v878 = vshrl.u32 %v877, 7
        %v879 = vsub.s32 %v876, %v878
        %v880 = vrot.slane %v864, %v879
        %v882 = vunpack.c.l.s4 1966171168
        %v883 = vunpack.c.0.s8 %v882
        %v884 = vlaneseq
        %v885 = vshrl.u32 %v884, 7
        %v886 = vsub.s32 %v883, %v885
        %v887 = vrot.slane %v871, %v886
        %v889 = vunpack.c.l.s4 1966171168
        %v890 = vunpack.c.0.s8 %v889
        %v891 = vlaneseq
        %v892 = vshrl.u32 %v891, 7
        %v893 = vsub.s32 %v890, %v892
        %v894 = vrot.slane %v872, %v893
        %v896 = vunpack.c.l.s4 1966171168
        %v897 = vunpack.c.0.s8 %v896
        %v898 = vlaneseq
        %v899 = vshrl.u32 %v898, 7
        %v900 = vsub.s32 %v897, %v899
        %v901 = vrot.slane %v873, %v900
        %v902 = vcombine.high %v880, %v880
        %v903 = vcombine.high %v887, %v887
        %v904 = vcombine.high %v894, %v894
        %v905 = vcombine.high %v901, %v901
        %s914 = scalar_lea.vmem %s386, 23
        %915 = vst.msk [vmem:[%s914] ss:$8 sm:$0x3] %vm829, %v880
        %916 = vst.msk [vmem:[%s914] ss:$8 sm:$0x0] %vm829, %v880
        %s917 = scalar_lea.vmem %s386, 87
        %918 = vst.msk [vmem:[%s917] ss:$8 sm:$0x3] %vm829, %v894
        %919 = vst.msk [vmem:[%s917] ss:$8 sm:$0x0] %vm829, %v894
        %s920 = scalar_lea.vmem %s386, 151
        %921 = vst.msk [vmem:[%s920] ss:$8 sm:$0x3] %vm829, %v902
        %922 = vst.msk [vmem:[%s920] ss:$8 sm:$0x0] %vm829, %v902
        %s923 = scalar_lea.vmem %s386, 215
        %924 = vst.msk [vmem:[%s923] ss:$8 sm:$0x3] %vm829, %v904
        %925 = vst.msk [vmem:[%s923] ss:$8 sm:$0x0] %vm829, %v904
        %s926 = scalar_lea.vmem %s386, 279
        %927 = vst.msk [vmem:[%s926] ss:$8 sm:$0x3] %vm829, %v887
        %928 = vst.msk [vmem:[%s926] ss:$8 sm:$0x0] %vm829, %v887
        %s929 = scalar_lea.vmem %s386, 343
        %930 = vst.msk [vmem:[%s929] ss:$8 sm:$0x3] %vm829, %v901
        %931 = vst.msk [vmem:[%s929] ss:$8 sm:$0x0] %vm829, %v901
        %s932 = scalar_lea.vmem %s386, 407
        %933 = vst.msk [vmem:[%s932] ss:$8 sm:$0x3] %vm829, %v903
        %934 = vst.msk [vmem:[%s932] ss:$8 sm:$0x0] %vm829, %v903
        %s935 = scalar_lea.vmem %s386, 471
        %936 = vst.msk [vmem:[%s935] ss:$8 sm:$0x3] %vm829, %v905
        %937 = vst.msk [vmem:[%s935] ss:$8 sm:$0x0] %vm829, %v905
        %v938 = vld [vmem:[%s376] sm:$0xff]
        %v939 = vld [vmem:[%s5] sm:$0xff]
        %v940 = vld [vmem:[%s5 + $0x8] sm:$0xff]
        %vm941 = vcmask 64512
        %v943 = vsel %vm941, %v938, 0
        %945 = vmatprep.subr.mxu0 %v940
        %946 = vmatpush1.msra.mxu0 %v939
        %947 = vmatprep.subr.mxu0 0.0
        %948 = vmatpush1.msra.mxu0 0.0
        %949 = vmatprep.subr.mxu0 0.0
        %950 = vmatpush1.msra.mxu0 0.0
        %951 = vmatprep.subr.mxu0 0.0
        %952 = vmatpush1.msra.mxu0 0.0
        %953 = vmatprep.subr.mxu0 0.0
        %954 = vmatpush1.msra.mxu0 0.0
        %955 = vmatprep.subr.mxu0 0.0
        %956 = vmatpush1.msra.mxu0 0.0
        %957 = vmatprep.subr.mxu0 0.0
        %958 = vmatpush1.msra.mxu0 0.0
        %959 = vmatprep.subr.mxu0 0.0
        %960 = vmatpush1.msra.mxu0 0.0
        %961 = vmatprep.subr.mxu0 0.0
        %962 = vmatpush1.msra.mxu0 0.0
        %963 = vmatprep.subr.mxu0 0.0
        %964 = vmatpush1.msra.mxu0 0.0
        %965 = vmatprep.subr.mxu0 0.0
        %966 = vmatpush1.msra.mxu0 0.0
        %967 = vmatprep.subr.mxu0 0.0
        %968 = vmatpush1.msra.mxu0 0.0
        %969 = vmatprep.subr.mxu0 0.0
        %970 = vmatpush1.msra.mxu0 0.0
        %971 = vmatprep.subr.mxu0 0.0
        %972 = vmatpush1.msra.mxu0 0.0
        %973 = vmatprep.subr.mxu0 0.0
        %974 = vmatpush1.msra.mxu0 0.0
        %975 = vmatprep.subr.mxu0 0.0
        %976 = vmatpush1.msra.mxu0 0.0
        %977 = vmatprep.subr.mxu0 0.0
        %978 = vmatpush1.msra.mxu0 0.0
        %979 = vmatprep.subr.mxu0 0.0
        %980 = vmatpush1.msra.mxu0 0.0
        %981 = vmatprep.subr.mxu0 0.0
        %982 = vmatpush1.msra.mxu0 0.0
        %983 = vmatprep.subr.mxu0 0.0
        %984 = vmatpush1.msra.mxu0 0.0
        %985 = vmatprep.subr.mxu0 0.0
        %986 = vmatpush1.msra.mxu0 0.0
        %987 = vmatprep.subr.mxu0 0.0
        %988 = vmatpush1.msra.mxu0 0.0
        %989 = vmatprep.subr.mxu0 0.0
        %990 = vmatpush1.msra.mxu0 0.0
        %991 = vmatprep.subr.mxu0 0.0
        %992 = vmatpush1.msra.mxu0 0.0
        %993 = vmatprep.subr.mxu0 0.0
        %994 = vmatpush1.msra.mxu0 0.0
        %995 = vmatprep.subr.mxu0 0.0
        %996 = vmatpush1.msra.mxu0 0.0
        %997 = vmatprep.subr.mxu0 0.0
        %998 = vmatpush1.msra.mxu0 0.0
        %999 = vmatprep.subr.mxu0 0.0
        %1000 = vmatpush1.msra.mxu0 0.0
        %1001 = vmatprep.subr.mxu0 0.0
        %1002 = vmatpush1.msra.mxu0 0.0
        %1003 = vmatprep.subr.mxu0 0.0
        %1004 = vmatpush1.msra.mxu0 0.0
        %1005 = vmatprep.subr.mxu0 0.0
        %1006 = vmatpush1.msra.mxu0 0.0
        %1007 = vmatprep.subr.mxu0 0.0
        %1008 = vmatpush1.msra.mxu0 0.0
        %1009 = vmatprep.mubr.f32.mxu0 0.0
        %1010 = vmatmul.mubr.f32.gmra.mrb[0].mxu0 %v943
        %v1011 = vpop.f32.mrb[0].mxu0
        %v1012 = vadd.f32 0.0, %v1011
        %v1013 = vpop.f32.mrb[0].mxu0
        %v1014 = vadd.f32 0.0, %v1013
        %1015 = vdwg.mxu0
        %v1018 = vcombine.low %v1012, %v1014
        %v1019 = vcombine.high %v1012, %v1014
        %v1021 = vunpack.c.l.s4 1966171168
        %v1022 = vunpack.c.0.s8 %v1021
        %v1023 = vlaneseq
        %v1024 = vshrl.u32 %v1023, 7
        %v1025 = vsub.s32 %v1022, %v1024
        %v1026 = vrot.slane %v1018, %v1025
        %v1028 = vunpack.c.l.s4 1966171168
        %v1029 = vunpack.c.0.s8 %v1028
        %v1030 = vlaneseq
        %v1031 = vshrl.u32 %v1030, 7
        %v1032 = vsub.s32 %v1029, %v1031
        %v1033 = vrot.slane %v1019, %v1032
        %v1034 = vcombine.high %v1026, %v1026
        %v1035 = vcombine.high %v1033, %v1033
        %v1037 = vunpack.c.l.s4 1966171168
        %v1038 = vunpack.c.0.s8 %v1037
        %v1039 = vlaneseq
        %v1040 = vshrl.u32 %v1039, 7
        %v1041 = vsub.s32 %v1038, %v1040
        %v1042 = vrot.slane %v1026, %v1041
        %v1044 = vunpack.c.l.s4 1966171168
        %v1045 = vunpack.c.0.s8 %v1044
        %v1046 = vlaneseq
        %v1047 = vshrl.u32 %v1046, 7
        %v1048 = vsub.s32 %v1045, %v1047
        %v1049 = vrot.slane %v1033, %v1048
        %v1051 = vunpack.c.l.s4 1966171168
        %v1052 = vunpack.c.0.s8 %v1051
        %v1053 = vlaneseq
        %v1054 = vshrl.u32 %v1053, 7
        %v1055 = vsub.s32 %v1052, %v1054
        %v1056 = vrot.slane %v1034, %v1055
        %v1058 = vunpack.c.l.s4 1966171168
        %v1059 = vunpack.c.0.s8 %v1058
        %v1060 = vlaneseq
        %v1061 = vshrl.u32 %v1060, 7
        %v1062 = vsub.s32 %v1059, %v1061
        %v1063 = vrot.slane %v1035, %v1062
        %v1064 = vcombine.high %v1042, %v1042
        %v1065 = vcombine.high %v1049, %v1049
        %v1066 = vcombine.high %v1056, %v1056
        %v1067 = vcombine.high %v1063, %v1063
        %s1076 = scalar_lea.vmem %s386, 34
        %1077 = vst.msk [vmem:[%s1076] ss:$8 sm:$0x3] %vm829, %v1042
        %1078 = vst.msk [vmem:[%s1076] ss:$8 sm:$0x0] %vm829, %v1042
        %s1079 = scalar_lea.vmem %s386, 98
        %1080 = vst.msk [vmem:[%s1079] ss:$8 sm:$0x3] %vm829, %v1056
        %1081 = vst.msk [vmem:[%s1079] ss:$8 sm:$0x0] %vm829, %v1056
        %s1082 = scalar_lea.vmem %s386, 162
        %1083 = vst.msk [vmem:[%s1082] ss:$8 sm:$0x3] %vm829, %v1064
        %1084 = vst.msk [vmem:[%s1082] ss:$8 sm:$0x0] %vm829, %v1064
        %s1085 = scalar_lea.vmem %s386, 226
        %1086 = vst.msk [vmem:[%s1085] ss:$8 sm:$0x3] %vm829, %v1066
        %1087 = vst.msk [vmem:[%s1085] ss:$8 sm:$0x0] %vm829, %v1066
        %s1088 = scalar_lea.vmem %s386, 290
        %1089 = vst.msk [vmem:[%s1088] ss:$8 sm:$0x3] %vm829, %v1049
        %1090 = vst.msk [vmem:[%s1088] ss:$8 sm:$0x0] %vm829, %v1049
        %s1091 = scalar_lea.vmem %s386, 354
        %1092 = vst.msk [vmem:[%s1091] ss:$8 sm:$0x3] %vm829, %v1063
        %1093 = vst.msk [vmem:[%s1091] ss:$8 sm:$0x0] %vm829, %v1063
        %s1094 = scalar_lea.vmem %s386, 418
        %1095 = vst.msk [vmem:[%s1094] ss:$8 sm:$0x3] %vm829, %v1065
        %1096 = vst.msk [vmem:[%s1094] ss:$8 sm:$0x0] %vm829, %v1065
        %s1097 = scalar_lea.vmem %s386, 482
        %1098 = vst.msk [vmem:[%s1097] ss:$8 sm:$0x3] %vm829, %v1067
        %1099 = vst.msk [vmem:[%s1097] ss:$8 sm:$0x0] %vm829, %v1067
        %v1100 = vld [vmem:[%s380] sm:$0xff]
        %vm1101 = vcmp.ge.f32.partialorder %v1100, 0.5
        %s1102 = scalar_lea.vmem %s7, 1
        %v1103 = vld [vmem:[%s1102] ss:$2 sm:$0x3]
        %v1104 = vld [vmem:[%s7] ss:$2 sm:$0x3]
        %v1105 = vsel %vm1101, 1, 0
        %1106 = vset.pattern.permute.xlu0 0
        %1107 = vperm.xlu0 %1106, %v1105
        %v1108 = vpop.permute.xlu0 %1107
        %vm1109 = vcmp.eq.s32.totalorder %v1108, 1
        %v1111 = vlaneseq
        %v1112 = vshrl.u32 %v1111, 7
        %v1113 = vsub.s32 0, %v1112
        %v1114 = vrot.slane %v1103, %v1113
        %v1115 = vlaneseq
        %v1116 = vshrl.u32 %v1115, 7
        %v1117 = vsub.s32 1, %v1116
        %v1118 = vrot.slane %v1103, %v1117
        %v1122 = vlaneseq
        %v1123 = vshrl.u32 %v1122, 7
        %v1124 = vsub.s32 0, %v1123
        %v1125 = vrot.slane %v1104, %v1124
        %v1126 = vlaneseq
        %v1127 = vshrl.u32 %v1126, 7
        %v1128 = vsub.s32 1, %v1127
        %v1129 = vrot.slane %v1104, %v1128
        %v1132 = vsel %vm1109, %v1114, %v1125
        %v1133 = vsel %vm1109, %v1118, %v1129
        %v1136 = vcombine.low %v1132, %v1133
        %v1137 = vcombine.high %v1132, %v1133
        %v1139 = vunpack.c.l.s4 1966171168
        %v1140 = vunpack.c.0.s8 %v1139
        %v1141 = vlaneseq
        %v1142 = vshrl.u32 %v1141, 7
        %v1143 = vsub.s32 %v1140, %v1142
        %v1144 = vrot.slane %v1136, %v1143
        %v1146 = vunpack.c.l.s4 1966171168
        %v1147 = vunpack.c.0.s8 %v1146
        %v1148 = vlaneseq
        %v1149 = vshrl.u32 %v1148, 7
        %v1150 = vsub.s32 %v1147, %v1149
        %v1151 = vrot.slane %v1137, %v1150
        %v1152 = vcombine.high %v1144, %v1144
        %v1153 = vcombine.high %v1151, %v1151
        %v1155 = vunpack.c.l.s4 1966171168
        %v1156 = vunpack.c.0.s8 %v1155
        %v1157 = vlaneseq
        %v1158 = vshrl.u32 %v1157, 7
        %v1159 = vsub.s32 %v1156, %v1158
        %v1160 = vrot.slane %v1144, %v1159
        %v1162 = vunpack.c.l.s4 1966171168
        %v1163 = vunpack.c.0.s8 %v1162
        %v1164 = vlaneseq
        %v1165 = vshrl.u32 %v1164, 7
        %v1166 = vsub.s32 %v1163, %v1165
        %v1167 = vrot.slane %v1151, %v1166
        %v1169 = vunpack.c.l.s4 1966171168
        %v1170 = vunpack.c.0.s8 %v1169
        %v1171 = vlaneseq
        %v1172 = vshrl.u32 %v1171, 7
        %v1173 = vsub.s32 %v1170, %v1172
        %v1174 = vrot.slane %v1152, %v1173
        %v1176 = vunpack.c.l.s4 1966171168
        %v1177 = vunpack.c.0.s8 %v1176
        %v1178 = vlaneseq
        %v1179 = vshrl.u32 %v1178, 7
        %v1180 = vsub.s32 %v1177, %v1179
        %v1181 = vrot.slane %v1153, %v1180
        %v1182 = vcombine.high %v1160, %v1160
        %v1183 = vcombine.high %v1167, %v1167
        %v1184 = vcombine.high %v1174, %v1174
        %v1185 = vcombine.high %v1181, %v1181
        %s1194 = scalar_lea.vmem %s386, 38
        %1195 = vst.msk [vmem:[%s1194] ss:$8 sm:$0x3] %vm829, %v1160
        %1196 = vst.msk [vmem:[%s1194] ss:$8 sm:$0x0] %vm829, %v1160
        %s1197 = scalar_lea.vmem %s386, 102
        %1198 = vst.msk [vmem:[%s1197] ss:$8 sm:$0x3] %vm829, %v1174
        %1199 = vst.msk [vmem:[%s1197] ss:$8 sm:$0x0] %vm829, %v1174
        %s1200 = scalar_lea.vmem %s386, 166
        %1201 = vst.msk [vmem:[%s1200] ss:$8 sm:$0x3] %vm829, %v1182
        %1202 = vst.msk [vmem:[%s1200] ss:$8 sm:$0x0] %vm829, %v1182
        %s1203 = scalar_lea.vmem %s386, 230
        %1204 = vst.msk [vmem:[%s1203] ss:$8 sm:$0x3] %vm829, %v1184
        %1205 = vst.msk [vmem:[%s1203] ss:$8 sm:$0x0] %vm829, %v1184
        %s1206 = scalar_lea.vmem %s386, 294
        %1207 = vst.msk [vmem:[%s1206] ss:$8 sm:$0x3] %vm829, %v1167
        %1208 = vst.msk [vmem:[%s1206] ss:$8 sm:$0x0] %vm829, %v1167
        %s1209 = scalar_lea.vmem %s386, 358
        %1210 = vst.msk [vmem:[%s1209] ss:$8 sm:$0x3] %vm829, %v1181
        %1211 = vst.msk [vmem:[%s1209] ss:$8 sm:$0x0] %vm829, %v1181
        %s1212 = scalar_lea.vmem %s386, 422
        %1213 = vst.msk [vmem:[%s1212] ss:$8 sm:$0x3] %vm829, %v1183
        %1214 = vst.msk [vmem:[%s1212] ss:$8 sm:$0x0] %vm829, %v1183
        %s1215 = scalar_lea.vmem %s386, 486
        %1216 = vst.msk [vmem:[%s1215] ss:$8 sm:$0x3] %vm829, %v1185
        %1217 = vst.msk [vmem:[%s1215] ss:$8 sm:$0x0] %vm829, %v1185
        %s1218 = smul.u32 8, %s19
        %p1219 = scmp.lt.s32.totalorder %s1218, 15
        %s1220 = scalar_select %p1219, %s1218, 15
        %s1221 = smul.addr %s1220, 8
        %s1222 = smul.addr %s1221, 8
        %s1223 = scalar_lea.vmem %s8, %s1222
        // Predicated region
        $region94: #{_lambda_.1} parent=88 // pred_check
          %p1224 = pneg %p220
        $region95: #{_lambda_.1} parent=88 // pred_check_branch
          %1226 = sbr.rel (%p1224) target = $region97
        $region96: #{_lambda_.1} parent=88 // pred_region
          %s1227 = smul.u32 8, %s19
        $region97: #{_lambda_.1} parent=88 // pred_fallthru
          _
      $region89: #{_lambda_.1} parent=5 // pred_fallthru
        _
      %p1228 = scmp.le.s32.totalorder 2, %s14
      // Predicated region
      $region98: #{_lambda_.1} parent=5 // pred_check
        %p1229 = pneg %p1228
      $region99: #{_lambda_.1} parent=5 // pred_check_branch
        %1231 = sbr.rel (%p1229) target = $region101
      $region100: #{_lambda_.1} parent=5 // pred_region
        %s1232 = ssub.s32 %s14, 2
        // Predicated region
        $region102: #{_lambda_.1} parent=100 // pred_check
          %p1233 = pneg %p226
        $region103: #{_lambda_.1} parent=100 // pred_check_branch
          %1235 = sbr.rel (%p1233) target = $region105
        $region104: #{_lambda_.1} parent=100 // pred_region
          %s1236 = smul.u32 8, %s20
          %p1237 = scmp.lt.s32.totalorder %s1236, 15
          %s1238 = scalar_select %p1237, %s1236, 15
          %s1239 = smul.addr %s1238, 8
          %s1240 = smul.addr %s1239, 8
          %s1241 = scalar_lea.vmem %s8, %s1240
        $region105: #{_lambda_.1} parent=100 // pred_fallthru
          _
      $region101: #{_lambda_.1} parent=5 // pred_fallthru
        _
    $region6: #{_lambda_.1} parent=1 // loop_footer
      %s18 = sadd.s32 1, %s14
    $region7: #{_lambda_.1} parent=1 // loop_footer_branch
      %13 = sbr.rel target = $region3
    $region8: #{_lambda_.1} parent=1 // loop_exit
      _

</llo_original>
